<compile_context>
chip_gen: v6e
topology: v6e:2x2x1
jax: 0.10.0
libtpu: 0.0.40
codegen_flags: <defaults>
</compile_context>

<pallas_src>
import jax
import jax.numpy as jnp
from jax.experimental import pallas as pl
from jax.experimental.pallas import tpu as pltpu


def _glove_kernel(c_idx_ref, o_idx_ref,        # scalar-prefetched indices (SMEM)
                  c_tab_ref, o_tab_ref,        # embedding tables (HBM, pl.ANY)
                  scal_ref,                    # packed [TM, 4] per-row scalars (VMEM)
                  out_ref,                     # (1, 8, 128) per-tile partial sum
                  c_buf, o_buf, sems):         # scratch
    t = pl.program_id(0)
    chunk = c_buf.shape[1]
    tm = scal_ref.shape[0]
    n_chunks = tm // chunk
    base = t * tm

    def issue_gather(chunk_idx, slot):
        """Start `chunk` row DMAs from both HBM tables into buffer `slot`."""
        row0 = base + chunk_idx * chunk

        def body(r, carry):
            ci = c_idx_ref[row0 + r]
            oi = o_idx_ref[row0 + r]
            pltpu.make_async_copy(c_tab_ref.at[pl.ds(ci, 1)],
                                  c_buf.at[slot, pl.ds(r, 1)],
                                  sems.at[0, slot]).start()
            pltpu.make_async_copy(o_tab_ref.at[pl.ds(oi, 1)],
                                  o_buf.at[slot, pl.ds(r, 1)],
                                  sems.at[1, slot]).start()
            return carry

        # Unrolled issue loop: descriptors retire 1/cycle through the
        # vector-misc slot; without unrolling, scalar loop overhead dominates.
        jax.lax.fori_loop(0, chunk, body, 0, unroll=8)

    def wait_gather(slot):
        """One aggregated wait per (table, slot): the descriptor covers the
        whole slot buffer, i.e. exactly chunk * e_pad * 4 bytes — the sum of
        the per-row DMA byte counts signalled on this semaphore."""
        pltpu.make_async_copy(c_buf.at[slot], c_buf.at[slot],
                              sems.at[0, slot]).wait()
        pltpu.make_async_copy(o_buf.at[slot], o_buf.at[slot],
                              sems.at[1, slot]).wait()

    # Prime the in-step pipeline with the first chunk.
    issue_gather(0, 0)

    def chunk_body(j, acc_vec):
        slot = j % 2

        # Prefetch the next chunk into the other slot (overlaps wait+compute).
        @pl.when(j + 1 < n_chunks)
        def _():
            issue_gather(j + 1, 1 - slot)

        wait_gather(slot)

        c_emb = c_buf[slot]                         # [chunk, e_pad] f32 (pad cols 0)
        o_emb = o_buf[slot]
        # Row-wise dot: VPU multiply + lane-axis (XLU) reduce — keep off the MXU.
        inner = jnp.sum(c_emb * o_emb, axis=-1, keepdims=True)     # [chunk, 1]

        off = pl.multiple_of(j * chunk, chunk)
        scal = scal_ref[pl.ds(off, chunk), :]       # (c_bias, o_bias, coocs, w)
        diff = inner + scal[:, 0:1] + scal[:, 1:2] - scal[:, 2:3]
        return acc_vec + scal[:, 3:4] * diff * diff                # [chunk, 1]

    acc = jax.lax.fori_loop(0, n_chunks, chunk_body,
                            jnp.zeros((chunk, 1), jnp.float32))

    # Per-tile partial sum written to a lane-dense block; the grid axis is
    # "parallel" so on v7x both TensorCores stream half the batch.  The final
    # reduction over tiles happens in JAX (numerically safer, too).
    out_ref[...] = jnp.broadcast_to(jnp.sum(acc), out_ref.shape)


def glove_loss(center, outside, coocs, weighting, params, *,
               tile_m=1024, chunk_m=128):
    """center/outside: int [B, 1]; coocs/weighting: f32 [B, 1] -> scalar loss."""
    c_tab = params["center_embedding"].astype(jnp.float32)
    o_tab = params["outside_embedding"].astype(jnp.float32)
    voc, E = c_tab.shape

    # Clamp indices so a bad index can never drive an out-of-bounds HBM DMA.
    c_idx = jnp.clip(center.reshape(-1).astype(jnp.int32), 0, voc - 1)
    o_idx = jnp.clip(outside.reshape(-1).astype(jnp.int32), 0, voc - 1)
    B = c_idx.shape[0]

    # Lane-dense embedding rows: pad E up to a multiple of 128 (zero columns
    # add nothing to the dot; a real training loop stores tables pre-padded).
    e_pad = pl.cdiv(E, 128) * 128
    if e_pad != E:
        c_tab = jnp.pad(c_tab, ((0, 0), (0, e_pad - E)))
        o_tab = jnp.pad(o_tab, ((0, 0), (0, e_pad - E)))

    # Bias gathers are 4 bytes/row -> cheap JAX glue.  Pack all four per-row
    # scalars into a single [B, 4] operand (one pipelined DMA, not four).
    c_b = params["center_bias"][c_idx].reshape(B, 1)
    o_b = params["outside_bias"][o_idx].reshape(B, 1)
    scal = jnp.concatenate(
        [c_b, o_b, coocs.reshape(B, 1), weighting.reshape(B, 1)],
        axis=1).astype(jnp.float32)                                  # [B, 4]

    # Batch tiling: tm rows per grid step, gathered in double-buffered chunks
    # of chunk_m rows inside the step.  Each grid step is self-contained, so
    # the batch axis can be marked "parallel" (v7x megacore).
    chunk_m = max(8, (chunk_m // 8) * 8)
    tile_m = max(chunk_m, (tile_m // chunk_m) * chunk_m)
    tm = min(tile_m, pl.cdiv(B, chunk_m) * chunk_m)
    chunk = min(chunk_m, tm)
    num_tiles = pl.cdiv(B, tm)
    b_pad = num_tiles * tm
    if b_pad != B:
        pad = b_pad - B
        c_idx = jnp.pad(c_idx, (0, pad))          # index 0: any valid row
        o_idx = jnp.pad(o_idx, (0, pad))
        scal = jnp.pad(scal, ((0, pad), (0, 0)))  # weight 0 -> no contribution

    # VMEM budget: double-buffered gather slabs + pipelined packed scalars +
    # output block.  Capped at 48 MiB to leave headroom on v7x (64 MiB/TC).
    need = 2 * 2 * chunk * e_pad * 4 + 2 * tm * 4 * 4 + 2 * 8 * 128 * 4
    vmem_limit = int(min(48 * 1024 * 1024, max(16 * 1024 * 1024, 4 * need)))

    grid_spec = pltpu.PrefetchScalarGridSpec(
        num_scalar_prefetch=2,
        grid=(num_tiles,),
        in_specs=[
            pl.BlockSpec(memory_space=pl.ANY),                  # center table (HBM)
            pl.BlockSpec(memory_space=pl.ANY),                  # outside table (HBM)
            pl.BlockSpec((tm, 4), lambda t, ci, oi: (t, 0)),    # packed scalars
        ],
        out_specs=pl.BlockSpec((1, 8, 128), lambda t, ci, oi: (t, 0, 0)),
        scratch_shapes=[
            pltpu.VMEM((2, chunk, e_pad), jnp.float32),         # center rows, 2 slots
            pltpu.VMEM((2, chunk, e_pad), jnp.float32),         # outside rows, 2 slots
            pltpu.SemaphoreType.DMA((2, 2)),                    # [table, slot]
        ],
    )

    partials = pl.pallas_call(
        _glove_kernel,
        out_shape=jax.ShapeDtypeStruct((num_tiles, 8, 128), jnp.float32),
        grid_spec=grid_spec,
        compiler_params=pltpu.CompilerParams(
            dimension_semantics=("parallel",),
            vmem_limit_bytes=vmem_limit,
        ),
    )(c_idx, o_idx, c_tab, o_tab, scal)

    # NOTE: for small vocabularies a faster variant keeps both tables resident
    # in VMEM and gathers in-core (removes the tiny per-row DMAs entirely);
    # kept single-path here for robustness across chip generations.
    return jnp.sum(partials[:, 0, 0])


def glove_loss_ref(center, outside, coocs, weighting, params):
    """Pure-JAX reference mirroring the PyTorch forward exactly."""
    c_emb = params["center_embedding"][center[:, 0]]
    o_emb = params["outside_embedding"][outside[:, 0]]
    c_b = params["center_bias"][center[:, 0]]
    o_b = params["outside_bias"][outside[:, 0]]
    inner = jnp.sum(o_emb * c_emb, axis=-1, keepdims=True)
    loss = weighting * (inner + c_b + o_b - coocs) ** 2
    return jnp.sum(loss)


def init_params(key, voc_size, emb_size):
    k1, k2, k3, k4 = jax.random.split(key, 4)
    # nn.Embedding default init ~ N(0, 1); deterministic synthetic weights.
    return {
        "center_embedding": jax.random.normal(k1, (voc_size, emb_size), jnp.float32),
        "outside_embedding": jax.random.normal(k2, (voc_size, emb_size), jnp.float32),
        "center_bias": jax.random.normal(k3, (voc_size, 1), jnp.float32),
        "outside_bias": jax.random.normal(k4, (voc_size, 1), jnp.float32),
    }


if __name__ == "__main__":
    # E=100 exercises lane padding (->128); B=22 exercises batch padding.
    voc_size, emb_size, batch = 64, 100, 22

    root = jax.random.PRNGKey(0)
    kp, kc, ko, kx, kw = jax.random.split(root, 5)

    params = init_params(kp, voc_size, emb_size)
    center = jax.random.randint(kc, (batch, 1), 0, voc_size, dtype=jnp.int32)
    outside = jax.random.randint(ko, (batch, 1), 0, voc_size, dtype=jnp.int32)
    coocs = jax.random.uniform(kx, (batch, 1), jnp.float32, 0.0, 5.0)
    weighting = jax.random.uniform(kw, (batch, 1), jnp.float32, 0.0, 1.0)

    ref = glove_loss_ref(center, outside, coocs, weighting, params)

    # Small tiles: 2 grid steps x 2 double-buffered gather chunks per step --
    # exercises the aggregated waits, unrolled DMA issue, the in-step
    # double-buffer, and both padding paths even at this toy batch size.
    out_small = glove_loss(center, outside, coocs, weighting, params,
                           tile_m=16, chunk_m=8)
    out_small = jax.block_until_ready(out_small)
    assert jnp.allclose(out_small, ref, rtol=1e-5, atol=1e-4), (out_small, ref)

    # Default (large-tile) configuration used for real workloads.
    out_default = glove_loss(center, outside, coocs, weighting, params)
    out_default = jax.block_until_ready(out_default)
    assert jnp.allclose(out_default, ref, rtol=1e-5, atol=1e-4), (out_default, ref)

    print("KERNEL_OK")
</pallas_src>

<mosaic_0001>
module attributes {stable_mosaic.version = 11 : i64} {
  func.func @_glove_kernel(%arg0: i32, %arg1: memref<32xi32, #tpu.memory_space<smem>>, %arg2: memref<32xi32, #tpu.memory_space<smem>>, %arg3: memref<64x128xf32, #tpu.memory_space<any>>, %arg4: memref<64x128xf32, #tpu.memory_space<any>>, %arg5: memref<16x4xf32, #tpu.memory_space<vmem>>, %arg6: memref<1x8x128xf32, #tpu.memory_space<vmem>>, %arg7: memref<2x8x128xf32, #tpu.memory_space<vmem>>, %arg8: memref<2x8x128xf32, #tpu.memory_space<vmem>>, %arg9: memref<2x2x!tpu.dma_semaphore, #tpu.memory_space<semaphore_mem>>) attributes {dimension_semantics = [#tpu.dimension_semantics<parallel>], iteration_bounds = array<i64: 2>, scalar_prefetch = 2 : i64, scratch_operands = 3 : i64, tpu.core_type = #tpu.core_type<tc>, window_params = [{}, {}, {transform_indices = @transform_2, window_bounds = array<i64: 16, 4>}, {transform_indices = @transform_3, window_bounds = array<i64: 1, 8, 128>}]} {
    %c16_i32 = arith.constant 16 : i32
    %0 = arith.muli %arg0, %c16_i32 : i32
    %c0_i32 = arith.constant 0 : i32
    %1 = arith.addi %0, %c0_i32 : i32
    %c0_i32_0 = arith.constant 0 : i32
    %2 = arith.addi %1, %c0_i32_0 : i32
    %3 = arith.index_cast %2 : i32 to index
    %4 = memref.load %arg1[%3] : memref<32xi32, #tpu.memory_space<smem>>
    %5 = arith.addi %1, %c0_i32_0 : i32
    %6 = arith.index_cast %5 : i32 to index
    %7 = memref.load %arg2[%6] : memref<32xi32, #tpu.memory_space<smem>>
    %c0_i32_1 = arith.constant 0 : i32
    %c0_i32_2 = arith.constant 0 : i32
    %c0_i32_3 = arith.constant 0 : i32
    %c0_i32_4 = arith.constant 0 : i32
    %8 = tpu.memref_slice %arg3[%4, %c0_i32_4] : memref<64x128xf32, #tpu.memory_space<any>> -> memref<1x128xf32, #tpu.memory_space<any>>
    %c0_i32_5 = arith.constant 0 : i32
    %9 = tpu.memref_slice %arg7[%c0_i32_1, %c0_i32_0, %c0_i32_5] : memref<2x8x128xf32, #tpu.memory_space<vmem>> -> memref<1x1x128xf32, #tpu.memory_space<vmem>>
    %10 = tpu.memref_squeeze %9 : memref<1x1x128xf32, #tpu.memory_space<vmem>> -> memref<1x128xf32, #tpu.memory_space<vmem>>
    %11 = tpu.memref_slice %arg9[%c0_i32_2, %c0_i32_3] : memref<2x2x!tpu.dma_semaphore, #tpu.memory_space<semaphore_mem>> -> memref<1x1x!tpu.dma_semaphore, #tpu.memory_space<semaphore_mem>>
    %12 = tpu.memref_squeeze %11 : memref<1x1x!tpu.dma_semaphore, #tpu.memory_space<semaphore_mem>> -> memref<!tpu.dma_semaphore, #tpu.memory_space<semaphore_mem>>
    tpu.enqueue_dma source(%8 : memref<1x128xf32, #tpu.memory_space<any>>) target(%10 : memref<1x128xf32, #tpu.memory_space<vmem>>) target_semaphore(%12 : memref<!tpu.dma_semaphore, #tpu.memory_space<semaphore_mem>>)
    %c0_i32_6 = arith.constant 0 : i32
    %c1_i32 = arith.constant 1 : i32
    %c0_i32_7 = arith.constant 0 : i32
    %c0_i32_8 = arith.constant 0 : i32
    %13 = tpu.memref_slice %arg4[%7, %c0_i32_8] : memref<64x128xf32, #tpu.memory_space<any>> -> memref<1x128xf32, #tpu.memory_space<any>>
    %c0_i32_9 = arith.constant 0 : i32
    %14 = tpu.memref_slice %arg8[%c0_i32_6, %c0_i32_0, %c0_i32_9] : memref<2x8x128xf32, #tpu.memory_space<vmem>> -> memref<1x1x128xf32, #tpu.memory_space<vmem>>
    %15 = tpu.memref_squeeze %14 : memref<1x1x128xf32, #tpu.memory_space<vmem>> -> memref<1x128xf32, #tpu.memory_space<vmem>>
    %16 = tpu.memref_slice %arg9[%c1_i32, %c0_i32_7] : memref<2x2x!tpu.dma_semaphore, #tpu.memory_space<semaphore_mem>> -> memref<1x1x!tpu.dma_semaphore, #tpu.memory_space<semaphore_mem>>
    %17 = tpu.memref_squeeze %16 : memref<1x1x!tpu.dma_semaphore, #tpu.memory_space<semaphore_mem>> -> memref<!tpu.dma_semaphore, #tpu.memory_space<semaphore_mem>>
    tpu.enqueue_dma source(%13 : memref<1x128xf32, #tpu.memory_space<any>>) target(%15 : memref<1x128xf32, #tpu.memory_space<vmem>>) target_semaphore(%17 : memref<!tpu.dma_semaphore, #tpu.memory_space<semaphore_mem>>)
    %c1_i32_10 = arith.constant 1 : i32
    %18 = arith.addi %1, %c1_i32_10 : i32
    %19 = arith.index_cast %18 : i32 to index
    %20 = memref.load %arg1[%19] : memref<32xi32, #tpu.memory_space<smem>>
    %21 = arith.addi %1, %c1_i32_10 : i32
    %22 = arith.index_cast %21 : i32 to index
    %23 = memref.load %arg2[%22] : memref<32xi32, #tpu.memory_space<smem>>
    %c0_i32_11 = arith.constant 0 : i32
    %c0_i32_12 = arith.constant 0 : i32
    %c0_i32_13 = arith.constant 0 : i32
    %c0_i32_14 = arith.constant 0 : i32
    %24 = tpu.memref_slice %arg3[%20, %c0_i32_14] : memref<64x128xf32, #tpu.memory_space<any>> -> memref<1x128xf32, #tpu.memory_space<any>>
    %c0_i32_15 = arith.constant 0 : i32
    %25 = tpu.memref_slice %arg7[%c0_i32_11, %c1_i32_10, %c0_i32_15] : memref<2x8x128xf32, #tpu.memory_space<vmem>> -> memref<1x1x128xf32, #tpu.memory_space<vmem>>
    %26 = tpu.memref_squeeze %25 : memref<1x1x128xf32, #tpu.memory_space<vmem>> -> memref<1x128xf32, #tpu.memory_space<vmem>>
    %27 = tpu.memref_slice %arg9[%c0_i32_12, %c0_i32_13] : memref<2x2x!tpu.dma_semaphore, #tpu.memory_space<semaphore_mem>> -> memref<1x1x!tpu.dma_semaphore, #tpu.memory_space<semaphore_mem>>
    %28 = tpu.memref_squeeze %27 : memref<1x1x!tpu.dma_semaphore, #tpu.memory_space<semaphore_mem>> -> memref<!tpu.dma_semaphore, #tpu.memory_space<semaphore_mem>>
    tpu.enqueue_dma source(%24 : memref<1x128xf32, #tpu.memory_space<any>>) target(%26 : memref<1x128xf32, #tpu.memory_space<vmem>>) target_semaphore(%28 : memref<!tpu.dma_semaphore, #tpu.memory_space<semaphore_mem>>)
    %c0_i32_16 = arith.constant 0 : i32
    %c1_i32_17 = arith.constant 1 : i32
    %c0_i32_18 = arith.constant 0 : i32
    %c0_i32_19 = arith.constant 0 : i32
    %29 = tpu.memref_slice %arg4[%23, %c0_i32_19] : memref<64x128xf32, #tpu.memory_space<any>> -> memref<1x128xf32, #tpu.memory_space<any>>
    %c0_i32_20 = arith.constant 0 : i32
    %30 = tpu.memref_slice %arg8[%c0_i32_16, %c1_i32_10, %c0_i32_20] : memref<2x8x128xf32, #tpu.memory_space<vmem>> -> memref<1x1x128xf32, #tpu.memory_space<vmem>>
    %31 = tpu.memref_squeeze %30 : memref<1x1x128xf32, #tpu.memory_space<vmem>> -> memref<1x128xf32, #tpu.memory_space<vmem>>
    %32 = tpu.memref_slice %arg9[%c1_i32_17, %c0_i32_18] : memref<2x2x!tpu.dma_semaphore, #tpu.memory_space<semaphore_mem>> -> memref<1x1x!tpu.dma_semaphore, #tpu.memory_space<semaphore_mem>>
    %33 = tpu.memref_squeeze %32 : memref<1x1x!tpu.dma_semaphore, #tpu.memory_space<semaphore_mem>> -> memref<!tpu.dma_semaphore, #tpu.memory_space<semaphore_mem>>
    tpu.enqueue_dma source(%29 : memref<1x128xf32, #tpu.memory_space<any>>) target(%31 : memref<1x128xf32, #tpu.memory_space<vmem>>) target_semaphore(%33 : memref<!tpu.dma_semaphore, #tpu.memory_space<semaphore_mem>>)
    %c2_i32 = arith.constant 2 : i32
    %34 = arith.addi %1, %c2_i32 : i32
    %35 = arith.index_cast %34 : i32 to index
    %36 = memref.load %arg1[%35] : memref<32xi32, #tpu.memory_space<smem>>
    %37 = arith.addi %1, %c2_i32 : i32
    %38 = arith.index_cast %37 : i32 to index
    %39 = memref.load %arg2[%38] : memref<32xi32, #tpu.memory_space<smem>>
    %c0_i32_21 = arith.constant 0 : i32
    %c0_i32_22 = arith.constant 0 : i32
    %c0_i32_23 = arith.constant 0 : i32
    %c0_i32_24 = arith.constant 0 : i32
    %40 = tpu.memref_slice %arg3[%36, %c0_i32_24] : memref<64x128xf32, #tpu.memory_space<any>> -> memref<1x128xf32, #tpu.memory_space<any>>
    %c0_i32_25 = arith.constant 0 : i32
    %41 = tpu.memref_slice %arg7[%c0_i32_21, %c2_i32, %c0_i32_25] : memref<2x8x128xf32, #tpu.memory_space<vmem>> -> memref<1x1x128xf32, #tpu.memory_space<vmem>>
    %42 = tpu.memref_squeeze %41 : memref<1x1x128xf32, #tpu.memory_space<vmem>> -> memref<1x128xf32, #tpu.memory_space<vmem>>
    %43 = tpu.memref_slice %arg9[%c0_i32_22, %c0_i32_23] : memref<2x2x!tpu.dma_semaphore, #tpu.memory_space<semaphore_mem>> -> memref<1x1x!tpu.dma_semaphore, #tpu.memory_space<semaphore_mem>>
    %44 = tpu.memref_squeeze %43 : memref<1x1x!tpu.dma_semaphore, #tpu.memory_space<semaphore_mem>> -> memref<!tpu.dma_semaphore, #tpu.memory_space<semaphore_mem>>
    tpu.enqueue_dma source(%40 : memref<1x128xf32, #tpu.memory_space<any>>) target(%42 : memref<1x128xf32, #tpu.memory_space<vmem>>) target_semaphore(%44 : memref<!tpu.dma_semaphore, #tpu.memory_space<semaphore_mem>>)
    %c0_i32_26 = arith.constant 0 : i32
    %c1_i32_27 = arith.constant 1 : i32
    %c0_i32_28 = arith.constant 0 : i32
    %c0_i32_29 = arith.constant 0 : i32
    %45 = tpu.memref_slice %arg4[%39, %c0_i32_29] : memref<64x128xf32, #tpu.memory_space<any>> -> memref<1x128xf32, #tpu.memory_space<any>>
    %c0_i32_30 = arith.constant 0 : i32
    %46 = tpu.memref_slice %arg8[%c0_i32_26, %c2_i32, %c0_i32_30] : memref<2x8x128xf32, #tpu.memory_space<vmem>> -> memref<1x1x128xf32, #tpu.memory_space<vmem>>
    %47 = tpu.memref_squeeze %46 : memref<1x1x128xf32, #tpu.memory_space<vmem>> -> memref<1x128xf32, #tpu.memory_space<vmem>>
    %48 = tpu.memref_slice %arg9[%c1_i32_27, %c0_i32_28] : memref<2x2x!tpu.dma_semaphore, #tpu.memory_space<semaphore_mem>> -> memref<1x1x!tpu.dma_semaphore, #tpu.memory_space<semaphore_mem>>
    %49 = tpu.memref_squeeze %48 : memref<1x1x!tpu.dma_semaphore, #tpu.memory_space<semaphore_mem>> -> memref<!tpu.dma_semaphore, #tpu.memory_space<semaphore_mem>>
    tpu.enqueue_dma source(%45 : memref<1x128xf32, #tpu.memory_space<any>>) target(%47 : memref<1x128xf32, #tpu.memory_space<vmem>>) target_semaphore(%49 : memref<!tpu.dma_semaphore, #tpu.memory_space<semaphore_mem>>)
    %c3_i32 = arith.constant 3 : i32
    %50 = arith.addi %1, %c3_i32 : i32
    %51 = arith.index_cast %50 : i32 to index
    %52 = memref.load %arg1[%51] : memref<32xi32, #tpu.memory_space<smem>>
    %53 = arith.addi %1, %c3_i32 : i32
    %54 = arith.index_cast %53 : i32 to index
    %55 = memref.load %arg2[%54] : memref<32xi32, #tpu.memory_space<smem>>
    %c0_i32_31 = arith.constant 0 : i32
    %c0_i32_32 = arith.constant 0 : i32
    %c0_i32_33 = arith.constant 0 : i32
    %c0_i32_34 = arith.constant 0 : i32
    %56 = tpu.memref_slice %arg3[%52, %c0_i32_34] : memref<64x128xf32, #tpu.memory_space<any>> -> memref<1x128xf32, #tpu.memory_space<any>>
    %c0_i32_35 = arith.constant 0 : i32
    %57 = tpu.memref_slice %arg7[%c0_i32_31, %c3_i32, %c0_i32_35] : memref<2x8x128xf32, #tpu.memory_space<vmem>> -> memref<1x1x128xf32, #tpu.memory_space<vmem>>
    %58 = tpu.memref_squeeze %57 : memref<1x1x128xf32, #tpu.memory_space<vmem>> -> memref<1x128xf32, #tpu.memory_space<vmem>>
    %59 = tpu.memref_slice %arg9[%c0_i32_32, %c0_i32_33] : memref<2x2x!tpu.dma_semaphore, #tpu.memory_space<semaphore_mem>> -> memref<1x1x!tpu.dma_semaphore, #tpu.memory_space<semaphore_mem>>
    %60 = tpu.memref_squeeze %59 : memref<1x1x!tpu.dma_semaphore, #tpu.memory_space<semaphore_mem>> -> memref<!tpu.dma_semaphore, #tpu.memory_space<semaphore_mem>>
    tpu.enqueue_dma source(%56 : memref<1x128xf32, #tpu.memory_space<any>>) target(%58 : memref<1x128xf32, #tpu.memory_space<vmem>>) target_semaphore(%60 : memref<!tpu.dma_semaphore, #tpu.memory_space<semaphore_mem>>)
    %c0_i32_36 = arith.constant 0 : i32
    %c1_i32_37 = arith.constant 1 : i32
    %c0_i32_38 = arith.constant 0 : i32
    %c0_i32_39 = arith.constant 0 : i32
    %61 = tpu.memref_slice %arg4[%55, %c0_i32_39] : memref<64x128xf32, #tpu.memory_space<any>> -> memref<1x128xf32, #tpu.memory_space<any>>
    %c0_i32_40 = arith.constant 0 : i32
    %62 = tpu.memref_slice %arg8[%c0_i32_36, %c3_i32, %c0_i32_40] : memref<2x8x128xf32, #tpu.memory_space<vmem>> -> memref<1x1x128xf32, #tpu.memory_space<vmem>>
    %63 = tpu.memref_squeeze %62 : memref<1x1x128xf32, #tpu.memory_space<vmem>> -> memref<1x128xf32, #tpu.memory_space<vmem>>
    %64 = tpu.memref_slice %arg9[%c1_i32_37, %c0_i32_38] : memref<2x2x!tpu.dma_semaphore, #tpu.memory_space<semaphore_mem>> -> memref<1x1x!tpu.dma_semaphore, #tpu.memory_space<semaphore_mem>>
    %65 = tpu.memref_squeeze %64 : memref<1x1x!tpu.dma_semaphore, #tpu.memory_space<semaphore_mem>> -> memref<!tpu.dma_semaphore, #tpu.memory_space<semaphore_mem>>
    tpu.enqueue_dma source(%61 : memref<1x128xf32, #tpu.memory_space<any>>) target(%63 : memref<1x128xf32, #tpu.memory_space<vmem>>) target_semaphore(%65 : memref<!tpu.dma_semaphore, #tpu.memory_space<semaphore_mem>>)
    %c4_i32 = arith.constant 4 : i32
    %66 = arith.addi %1, %c4_i32 : i32
    %67 = arith.index_cast %66 : i32 to index
    %68 = memref.load %arg1[%67] : memref<32xi32, #tpu.memory_space<smem>>
    %69 = arith.addi %1, %c4_i32 : i32
    %70 = arith.index_cast %69 : i32 to index
    %71 = memref.load %arg2[%70] : memref<32xi32, #tpu.memory_space<smem>>
    %c0_i32_41 = arith.constant 0 : i32
    %c0_i32_42 = arith.constant 0 : i32
    %c0_i32_43 = arith.constant 0 : i32
    %c0_i32_44 = arith.constant 0 : i32
    %72 = tpu.memref_slice %arg3[%68, %c0_i32_44] : memref<64x128xf32, #tpu.memory_space<any>> -> memref<1x128xf32, #tpu.memory_space<any>>
    %c0_i32_45 = arith.constant 0 : i32
    %73 = tpu.memref_slice %arg7[%c0_i32_41, %c4_i32, %c0_i32_45] : memref<2x8x128xf32, #tpu.memory_space<vmem>> -> memref<1x1x128xf32, #tpu.memory_space<vmem>>
    %74 = tpu.memref_squeeze %73 : memref<1x1x128xf32, #tpu.memory_space<vmem>> -> memref<1x128xf32, #tpu.memory_space<vmem>>
    %75 = tpu.memref_slice %arg9[%c0_i32_42, %c0_i32_43] : memref<2x2x!tpu.dma_semaphore, #tpu.memory_space<semaphore_mem>> -> memref<1x1x!tpu.dma_semaphore, #tpu.memory_space<semaphore_mem>>
    %76 = tpu.memref_squeeze %75 : memref<1x1x!tpu.dma_semaphore, #tpu.memory_space<semaphore_mem>> -> memref<!tpu.dma_semaphore, #tpu.memory_space<semaphore_mem>>
    tpu.enqueue_dma source(%72 : memref<1x128xf32, #tpu.memory_space<any>>) target(%74 : memref<1x128xf32, #tpu.memory_space<vmem>>) target_semaphore(%76 : memref<!tpu.dma_semaphore, #tpu.memory_space<semaphore_mem>>)
    %c0_i32_46 = arith.constant 0 : i32
    %c1_i32_47 = arith.constant 1 : i32
    %c0_i32_48 = arith.constant 0 : i32
    %c0_i32_49 = arith.constant 0 : i32
    %77 = tpu.memref_slice %arg4[%71, %c0_i32_49] : memref<64x128xf32, #tpu.memory_space<any>> -> memref<1x128xf32, #tpu.memory_space<any>>
    %c0_i32_50 = arith.constant 0 : i32
    %78 = tpu.memref_slice %arg8[%c0_i32_46, %c4_i32, %c0_i32_50] : memref<2x8x128xf32, #tpu.memory_space<vmem>> -> memref<1x1x128xf32, #tpu.memory_space<vmem>>
    %79 = tpu.memref_squeeze %78 : memref<1x1x128xf32, #tpu.memory_space<vmem>> -> memref<1x128xf32, #tpu.memory_space<vmem>>
    %80 = tpu.memref_slice %arg9[%c1_i32_47, %c0_i32_48] : memref<2x2x!tpu.dma_semaphore, #tpu.memory_space<semaphore_mem>> -> memref<1x1x!tpu.dma_semaphore, #tpu.memory_space<semaphore_mem>>
    %81 = tpu.memref_squeeze %80 : memref<1x1x!tpu.dma_semaphore, #tpu.memory_space<semaphore_mem>> -> memref<!tpu.dma_semaphore, #tpu.memory_space<semaphore_mem>>
    tpu.enqueue_dma source(%77 : memref<1x128xf32, #tpu.memory_space<any>>) target(%79 : memref<1x128xf32, #tpu.memory_space<vmem>>) target_semaphore(%81 : memref<!tpu.dma_semaphore, #tpu.memory_space<semaphore_mem>>)
    %c5_i32 = arith.constant 5 : i32
    %82 = arith.addi %1, %c5_i32 : i32
    %83 = arith.index_cast %82 : i32 to index
    %84 = memref.load %arg1[%83] : memref<32xi32, #tpu.memory_space<smem>>
    %85 = arith.addi %1, %c5_i32 : i32
    %86 = arith.index_cast %85 : i32 to index
    %87 = memref.load %arg2[%86] : memref<32xi32, #tpu.memory_space<smem>>
    %c0_i32_51 = arith.constant 0 : i32
    %c0_i32_52 = arith.constant 0 : i32
    %c0_i32_53 = arith.constant 0 : i32
    %c0_i32_54 = arith.constant 0 : i32
    %88 = tpu.memref_slice %arg3[%84, %c0_i32_54] : memref<64x128xf32, #tpu.memory_space<any>> -> memref<1x128xf32, #tpu.memory_space<any>>
    %c0_i32_55 = arith.constant 0 : i32
    %89 = tpu.memref_slice %arg7[%c0_i32_51, %c5_i32, %c0_i32_55] : memref<2x8x128xf32, #tpu.memory_space<vmem>> -> memref<1x1x128xf32, #tpu.memory_space<vmem>>
    %90 = tpu.memref_squeeze %89 : memref<1x1x128xf32, #tpu.memory_space<vmem>> -> memref<1x128xf32, #tpu.memory_space<vmem>>
    %91 = tpu.memref_slice %arg9[%c0_i32_52, %c0_i32_53] : memref<2x2x!tpu.dma_semaphore, #tpu.memory_space<semaphore_mem>> -> memref<1x1x!tpu.dma_semaphore, #tpu.memory_space<semaphore_mem>>
    %92 = tpu.memref_squeeze %91 : memref<1x1x!tpu.dma_semaphore, #tpu.memory_space<semaphore_mem>> -> memref<!tpu.dma_semaphore, #tpu.memory_space<semaphore_mem>>
    tpu.enqueue_dma source(%88 : memref<1x128xf32, #tpu.memory_space<any>>) target(%90 : memref<1x128xf32, #tpu.memory_space<vmem>>) target_semaphore(%92 : memref<!tpu.dma_semaphore, #tpu.memory_space<semaphore_mem>>)
    %c0_i32_56 = arith.constant 0 : i32
    %c1_i32_57 = arith.constant 1 : i32
    %c0_i32_58 = arith.constant 0 : i32
    %c0_i32_59 = arith.constant 0 : i32
    %93 = tpu.memref_slice %arg4[%87, %c0_i32_59] : memref<64x128xf32, #tpu.memory_space<any>> -> memref<1x128xf32, #tpu.memory_space<any>>
    %c0_i32_60 = arith.constant 0 : i32
    %94 = tpu.memref_slice %arg8[%c0_i32_56, %c5_i32, %c0_i32_60] : memref<2x8x128xf32, #tpu.memory_space<vmem>> -> memref<1x1x128xf32, #tpu.memory_space<vmem>>
    %95 = tpu.memref_squeeze %94 : memref<1x1x128xf32, #tpu.memory_space<vmem>> -> memref<1x128xf32, #tpu.memory_space<vmem>>
    %96 = tpu.memref_slice %arg9[%c1_i32_57, %c0_i32_58] : memref<2x2x!tpu.dma_semaphore, #tpu.memory_space<semaphore_mem>> -> memref<1x1x!tpu.dma_semaphore, #tpu.memory_space<semaphore_mem>>
    %97 = tpu.memref_squeeze %96 : memref<1x1x!tpu.dma_semaphore, #tpu.memory_space<semaphore_mem>> -> memref<!tpu.dma_semaphore, #tpu.memory_space<semaphore_mem>>
    tpu.enqueue_dma source(%93 : memref<1x128xf32, #tpu.memory_space<any>>) target(%95 : memref<1x128xf32, #tpu.memory_space<vmem>>) target_semaphore(%97 : memref<!tpu.dma_semaphore, #tpu.memory_space<semaphore_mem>>)
    %c6_i32 = arith.constant 6 : i32
    %98 = arith.addi %1, %c6_i32 : i32
    %99 = arith.index_cast %98 : i32 to index
    %100 = memref.load %arg1[%99] : memref<32xi32, #tpu.memory_space<smem>>
    %101 = arith.addi %1, %c6_i32 : i32
    %102 = arith.index_cast %101 : i32 to index
    %103 = memref.load %arg2[%102] : memref<32xi32, #tpu.memory_space<smem>>
    %c0_i32_61 = arith.constant 0 : i32
    %c0_i32_62 = arith.constant 0 : i32
    %c0_i32_63 = arith.constant 0 : i32
    %c0_i32_64 = arith.constant 0 : i32
    %104 = tpu.memref_slice %arg3[%100, %c0_i32_64] : memref<64x128xf32, #tpu.memory_space<any>> -> memref<1x128xf32, #tpu.memory_space<any>>
    %c0_i32_65 = arith.constant 0 : i32
    %105 = tpu.memref_slice %arg7[%c0_i32_61, %c6_i32, %c0_i32_65] : memref<2x8x128xf32, #tpu.memory_space<vmem>> -> memref<1x1x128xf32, #tpu.memory_space<vmem>>
    %106 = tpu.memref_squeeze %105 : memref<1x1x128xf32, #tpu.memory_space<vmem>> -> memref<1x128xf32, #tpu.memory_space<vmem>>
    %107 = tpu.memref_slice %arg9[%c0_i32_62, %c0_i32_63] : memref<2x2x!tpu.dma_semaphore, #tpu.memory_space<semaphore_mem>> -> memref<1x1x!tpu.dma_semaphore, #tpu.memory_space<semaphore_mem>>
    %108 = tpu.memref_squeeze %107 : memref<1x1x!tpu.dma_semaphore, #tpu.memory_space<semaphore_mem>> -> memref<!tpu.dma_semaphore, #tpu.memory_space<semaphore_mem>>
    tpu.enqueue_dma source(%104 : memref<1x128xf32, #tpu.memory_space<any>>) target(%106 : memref<1x128xf32, #tpu.memory_space<vmem>>) target_semaphore(%108 : memref<!tpu.dma_semaphore, #tpu.memory_space<semaphore_mem>>)
    %c0_i32_66 = arith.constant 0 : i32
    %c1_i32_67 = arith.constant 1 : i32
    %c0_i32_68 = arith.constant 0 : i32
    %c0_i32_69 = arith.constant 0 : i32
    %109 = tpu.memref_slice %arg4[%103, %c0_i32_69] : memref<64x128xf32, #tpu.memory_space<any>> -> memref<1x128xf32, #tpu.memory_space<any>>
    %c0_i32_70 = arith.constant 0 : i32
    %110 = tpu.memref_slice %arg8[%c0_i32_66, %c6_i32, %c0_i32_70] : memref<2x8x128xf32, #tpu.memory_space<vmem>> -> memref<1x1x128xf32, #tpu.memory_space<vmem>>
    %111 = tpu.memref_squeeze %110 : memref<1x1x128xf32, #tpu.memory_space<vmem>> -> memref<1x128xf32, #tpu.memory_space<vmem>>
    %112 = tpu.memref_slice %arg9[%c1_i32_67, %c0_i32_68] : memref<2x2x!tpu.dma_semaphore, #tpu.memory_space<semaphore_mem>> -> memref<1x1x!tpu.dma_semaphore, #tpu.memory_space<semaphore_mem>>
    %113 = tpu.memref_squeeze %112 : memref<1x1x!tpu.dma_semaphore, #tpu.memory_space<semaphore_mem>> -> memref<!tpu.dma_semaphore, #tpu.memory_space<semaphore_mem>>
    tpu.enqueue_dma source(%109 : memref<1x128xf32, #tpu.memory_space<any>>) target(%111 : memref<1x128xf32, #tpu.memory_space<vmem>>) target_semaphore(%113 : memref<!tpu.dma_semaphore, #tpu.memory_space<semaphore_mem>>)
    %c7_i32 = arith.constant 7 : i32
    %114 = arith.addi %1, %c7_i32 : i32
    %115 = arith.index_cast %114 : i32 to index
    %116 = memref.load %arg1[%115] : memref<32xi32, #tpu.memory_space<smem>>
    %117 = arith.addi %1, %c7_i32 : i32
    %118 = arith.index_cast %117 : i32 to index
    %119 = memref.load %arg2[%118] : memref<32xi32, #tpu.memory_space<smem>>
    %c0_i32_71 = arith.constant 0 : i32
    %c0_i32_72 = arith.constant 0 : i32
    %c0_i32_73 = arith.constant 0 : i32
    %c0_i32_74 = arith.constant 0 : i32
    %120 = tpu.memref_slice %arg3[%116, %c0_i32_74] : memref<64x128xf32, #tpu.memory_space<any>> -> memref<1x128xf32, #tpu.memory_space<any>>
    %c0_i32_75 = arith.constant 0 : i32
    %121 = tpu.memref_slice %arg7[%c0_i32_71, %c7_i32, %c0_i32_75] : memref<2x8x128xf32, #tpu.memory_space<vmem>> -> memref<1x1x128xf32, #tpu.memory_space<vmem>>
    %122 = tpu.memref_squeeze %121 : memref<1x1x128xf32, #tpu.memory_space<vmem>> -> memref<1x128xf32, #tpu.memory_space<vmem>>
    %123 = tpu.memref_slice %arg9[%c0_i32_72, %c0_i32_73] : memref<2x2x!tpu.dma_semaphore, #tpu.memory_space<semaphore_mem>> -> memref<1x1x!tpu.dma_semaphore, #tpu.memory_space<semaphore_mem>>
    %124 = tpu.memref_squeeze %123 : memref<1x1x!tpu.dma_semaphore, #tpu.memory_space<semaphore_mem>> -> memref<!tpu.dma_semaphore, #tpu.memory_space<semaphore_mem>>
    tpu.enqueue_dma source(%120 : memref<1x128xf32, #tpu.memory_space<any>>) target(%122 : memref<1x128xf32, #tpu.memory_space<vmem>>) target_semaphore(%124 : memref<!tpu.dma_semaphore, #tpu.memory_space<semaphore_mem>>)
    %c0_i32_76 = arith.constant 0 : i32
    %c1_i32_77 = arith.constant 1 : i32
    %c0_i32_78 = arith.constant 0 : i32
    %c0_i32_79 = arith.constant 0 : i32
    %125 = tpu.memref_slice %arg4[%119, %c0_i32_79] : memref<64x128xf32, #tpu.memory_space<any>> -> memref<1x128xf32, #tpu.memory_space<any>>
    %c0_i32_80 = arith.constant 0 : i32
    %126 = tpu.memref_slice %arg8[%c0_i32_76, %c7_i32, %c0_i32_80] : memref<2x8x128xf32, #tpu.memory_space<vmem>> -> memref<1x1x128xf32, #tpu.memory_space<vmem>>
    %127 = tpu.memref_squeeze %126 : memref<1x1x128xf32, #tpu.memory_space<vmem>> -> memref<1x128xf32, #tpu.memory_space<vmem>>
    %128 = tpu.memref_slice %arg9[%c1_i32_77, %c0_i32_78] : memref<2x2x!tpu.dma_semaphore, #tpu.memory_space<semaphore_mem>> -> memref<1x1x!tpu.dma_semaphore, #tpu.memory_space<semaphore_mem>>
    %129 = tpu.memref_squeeze %128 : memref<1x1x!tpu.dma_semaphore, #tpu.memory_space<semaphore_mem>> -> memref<!tpu.dma_semaphore, #tpu.memory_space<semaphore_mem>>
    tpu.enqueue_dma source(%125 : memref<1x128xf32, #tpu.memory_space<any>>) target(%127 : memref<1x128xf32, #tpu.memory_space<vmem>>) target_semaphore(%129 : memref<!tpu.dma_semaphore, #tpu.memory_space<semaphore_mem>>)
    %c8_i32 = arith.constant 8 : i32
    %cst = arith.constant 0.000000e+00 : f32
    %130 = vector.broadcast %cst : f32 to vector<8x1xf32>
    %c0_i32_81 = arith.constant 0 : i32
    %c2_i32_82 = arith.constant 2 : i32
    %131 = arith.addi %c0_i32_81, %c2_i32_82 : i32
    %c1_i32_83 = arith.constant 1 : i32
    %132 = scf.for %arg10 = %c0_i32_81 to %131 step %c1_i32_83 iter_args(%arg11 = %130) -> (vector<8x1xf32>)  : i32 {
      %c2_i32_88 = arith.constant 2 : i32
      %c0_i32_89 = arith.constant 0 : i32
      %139 = arith.cmpi eq, %c2_i32_88, %c0_i32_89 : i32
      %c1_i32_90 = arith.constant 1 : i32
      %140 = arith.select %139, %c1_i32_90, %c2_i32_88 : i32
      %141 = arith.remsi %arg10, %140 : i32
      %c0_i32_91 = arith.constant 0 : i32
      %142 = arith.cmpi ne, %141, %c0_i32_91 : i32
      %c0_i32_92 = arith.constant 0 : i32
      %143 = arith.cmpi slt, %141, %c0_i32_92 : i32
      %c0_i32_93 = arith.constant 0 : i32
      %144 = arith.cmpi slt, %140, %c0_i32_93 : i32
      %145 = arith.xori %143, %144 : i1
      %146 = arith.andi %145, %142 : i1
      %147 = arith.addi %141, %140 : i32
      %148 = arith.select %146, %147, %141 : i32
      %c1_i32_94 = arith.constant 1 : i32
      %149 = arith.addi %arg10, %c1_i32_94 : i32
      %c2_i32_95 = arith.constant 2 : i32
      %150 = arith.cmpi slt, %149, %c2_i32_95 : i32
      %151 = arith.extui %150 : i1 to i32
      %c0_i32_96 = arith.constant 0 : i32
      %152 = arith.cmpi ne, %151, %c0_i32_96 : i32
      scf.if %152 {
        %c1_i32_114 = arith.constant 1 : i32
        %188 = arith.addi %arg10, %c1_i32_114 : i32
        %c1_i32_115 = arith.constant 1 : i32
        %189 = arith.subi %c1_i32_115, %148 : i32
        %c8_i32_116 = arith.constant 8 : i32
        %190 = arith.muli %188, %c8_i32_116 : i32
        %191 = arith.addi %0, %190 : i32
        %c0_i32_117 = arith.constant 0 : i32
        %192 = arith.addi %191, %c0_i32_117 : i32
        %193 = arith.index_cast %192 : i32 to index
        %194 = memref.load %arg1[%193] : memref<32xi32, #tpu.memory_space<smem>>
        %195 = arith.addi %191, %c0_i32_117 : i32
        %196 = arith.index_cast %195 : i32 to index
        %197 = memref.load %arg2[%196] : memref<32xi32, #tpu.memory_space<smem>>
        %c0_i32_118 = arith.constant 0 : i32
        %c0_i32_119 = arith.constant 0 : i32
        %198 = tpu.memref_slice %arg3[%194, %c0_i32_119] : memref<64x128xf32, #tpu.memory_space<any>> -> memref<1x128xf32, #tpu.memory_space<any>>
        %c0_i32_120 = arith.constant 0 : i32
        %199 = tpu.memref_slice %arg7[%189, %c0_i32_117, %c0_i32_120] : memref<2x8x128xf32, #tpu.memory_space<vmem>> -> memref<1x1x128xf32, #tpu.memory_space<vmem>>
        %200 = tpu.memref_squeeze %199 : memref<1x1x128xf32, #tpu.memory_space<vmem>> -> memref<1x128xf32, #tpu.memory_space<vmem>>
        %201 = tpu.memref_slice %arg9[%c0_i32_118, %189] : memref<2x2x!tpu.dma_semaphore, #tpu.memory_space<semaphore_mem>> -> memref<1x1x!tpu.dma_semaphore, #tpu.memory_space<semaphore_mem>>
        %202 = tpu.memref_squeeze %201 : memref<1x1x!tpu.dma_semaphore, #tpu.memory_space<semaphore_mem>> -> memref<!tpu.dma_semaphore, #tpu.memory_space<semaphore_mem>>
        tpu.enqueue_dma source(%198 : memref<1x128xf32, #tpu.memory_space<any>>) target(%200 : memref<1x128xf32, #tpu.memory_space<vmem>>) target_semaphore(%202 : memref<!tpu.dma_semaphore, #tpu.memory_space<semaphore_mem>>)
        %c1_i32_121 = arith.constant 1 : i32
        %c0_i32_122 = arith.constant 0 : i32
        %203 = tpu.memref_slice %arg4[%197, %c0_i32_122] : memref<64x128xf32, #tpu.memory_space<any>> -> memref<1x128xf32, #tpu.memory_space<any>>
        %c0_i32_123 = arith.constant 0 : i32
        %204 = tpu.memref_slice %arg8[%189, %c0_i32_117, %c0_i32_123] : memref<2x8x128xf32, #tpu.memory_space<vmem>> -> memref<1x1x128xf32, #tpu.memory_space<vmem>>
        %205 = tpu.memref_squeeze %204 : memref<1x1x128xf32, #tpu.memory_space<vmem>> -> memref<1x128xf32, #tpu.memory_space<vmem>>
        %206 = tpu.memref_slice %arg9[%c1_i32_121, %189] : memref<2x2x!tpu.dma_semaphore, #tpu.memory_space<semaphore_mem>> -> memref<1x1x!tpu.dma_semaphore, #tpu.memory_space<semaphore_mem>>
        %207 = tpu.memref_squeeze %206 : memref<1x1x!tpu.dma_semaphore, #tpu.memory_space<semaphore_mem>> -> memref<!tpu.dma_semaphore, #tpu.memory_space<semaphore_mem>>
        tpu.enqueue_dma source(%203 : memref<1x128xf32, #tpu.memory_space<any>>) target(%205 : memref<1x128xf32, #tpu.memory_space<vmem>>) target_semaphore(%207 : memref<!tpu.dma_semaphore, #tpu.memory_space<semaphore_mem>>)
        %c1_i32_124 = arith.constant 1 : i32
        %208 = arith.addi %191, %c1_i32_124 : i32
        %209 = arith.index_cast %208 : i32 to index
        %210 = memref.load %arg1[%209] : memref<32xi32, #tpu.memory_space<smem>>
        %211 = arith.addi %191, %c1_i32_124 : i32
        %212 = arith.index_cast %211 : i32 to index
        %213 = memref.load %arg2[%212] : memref<32xi32, #tpu.memory_space<smem>>
        %c0_i32_125 = arith.constant 0 : i32
        %c0_i32_126 = arith.constant 0 : i32
        %214 = tpu.memref_slice %arg3[%210, %c0_i32_126] : memref<64x128xf32, #tpu.memory_space<any>> -> memref<1x128xf32, #tpu.memory_space<any>>
        %c0_i32_127 = arith.constant 0 : i32
        %215 = tpu.memref_slice %arg7[%189, %c1_i32_124, %c0_i32_127] : memref<2x8x128xf32, #tpu.memory_space<vmem>> -> memref<1x1x128xf32, #tpu.memory_space<vmem>>
        %216 = tpu.memref_squeeze %215 : memref<1x1x128xf32, #tpu.memory_space<vmem>> -> memref<1x128xf32, #tpu.memory_space<vmem>>
        %217 = tpu.memref_slice %arg9[%c0_i32_125, %189] : memref<2x2x!tpu.dma_semaphore, #tpu.memory_space<semaphore_mem>> -> memref<1x1x!tpu.dma_semaphore, #tpu.memory_space<semaphore_mem>>
        %218 = tpu.memref_squeeze %217 : memref<1x1x!tpu.dma_semaphore, #tpu.memory_space<semaphore_mem>> -> memref<!tpu.dma_semaphore, #tpu.memory_space<semaphore_mem>>
        tpu.enqueue_dma source(%214 : memref<1x128xf32, #tpu.memory_space<any>>) target(%216 : memref<1x128xf32, #tpu.memory_space<vmem>>) target_semaphore(%218 : memref<!tpu.dma_semaphore, #tpu.memory_space<semaphore_mem>>)
        %c1_i32_128 = arith.constant 1 : i32
        %c0_i32_129 = arith.constant 0 : i32
        %219 = tpu.memref_slice %arg4[%213, %c0_i32_129] : memref<64x128xf32, #tpu.memory_space<any>> -> memref<1x128xf32, #tpu.memory_space<any>>
        %c0_i32_130 = arith.constant 0 : i32
        %220 = tpu.memref_slice %arg8[%189, %c1_i32_124, %c0_i32_130] : memref<2x8x128xf32, #tpu.memory_space<vmem>> -> memref<1x1x128xf32, #tpu.memory_space<vmem>>
        %221 = tpu.memref_squeeze %220 : memref<1x1x128xf32, #tpu.memory_space<vmem>> -> memref<1x128xf32, #tpu.memory_space<vmem>>
        %222 = tpu.memref_slice %arg9[%c1_i32_128, %189] : memref<2x2x!tpu.dma_semaphore, #tpu.memory_space<semaphore_mem>> -> memref<1x1x!tpu.dma_semaphore, #tpu.memory_space<semaphore_mem>>
        %223 = tpu.memref_squeeze %222 : memref<1x1x!tpu.dma_semaphore, #tpu.memory_space<semaphore_mem>> -> memref<!tpu.dma_semaphore, #tpu.memory_space<semaphore_mem>>
        tpu.enqueue_dma source(%219 : memref<1x128xf32, #tpu.memory_space<any>>) target(%221 : memref<1x128xf32, #tpu.memory_space<vmem>>) target_semaphore(%223 : memref<!tpu.dma_semaphore, #tpu.memory_space<semaphore_mem>>)
        %c2_i32_131 = arith.constant 2 : i32
        %224 = arith.addi %191, %c2_i32_131 : i32
        %225 = arith.index_cast %224 : i32 to index
        %226 = memref.load %arg1[%225] : memref<32xi32, #tpu.memory_space<smem>>
        %227 = arith.addi %191, %c2_i32_131 : i32
        %228 = arith.index_cast %227 : i32 to index
        %229 = memref.load %arg2[%228] : memref<32xi32, #tpu.memory_space<smem>>
        %c0_i32_132 = arith.constant 0 : i32
        %c0_i32_133 = arith.constant 0 : i32
        %230 = tpu.memref_slice %arg3[%226, %c0_i32_133] : memref<64x128xf32, #tpu.memory_space<any>> -> memref<1x128xf32, #tpu.memory_space<any>>
        %c0_i32_134 = arith.constant 0 : i32
        %231 = tpu.memref_slice %arg7[%189, %c2_i32_131, %c0_i32_134] : memref<2x8x128xf32, #tpu.memory_space<vmem>> -> memref<1x1x128xf32, #tpu.memory_space<vmem>>
        %232 = tpu.memref_squeeze %231 : memref<1x1x128xf32, #tpu.memory_space<vmem>> -> memref<1x128xf32, #tpu.memory_space<vmem>>
        %233 = tpu.memref_slice %arg9[%c0_i32_132, %189] : memref<2x2x!tpu.dma_semaphore, #tpu.memory_space<semaphore_mem>> -> memref<1x1x!tpu.dma_semaphore, #tpu.memory_space<semaphore_mem>>
        %234 = tpu.memref_squeeze %233 : memref<1x1x!tpu.dma_semaphore, #tpu.memory_space<semaphore_mem>> -> memref<!tpu.dma_semaphore, #tpu.memory_space<semaphore_mem>>
        tpu.enqueue_dma source(%230 : memref<1x128xf32, #tpu.memory_space<any>>) target(%232 : memref<1x128xf32, #tpu.memory_space<vmem>>) target_semaphore(%234 : memref<!tpu.dma_semaphore, #tpu.memory_space<semaphore_mem>>)
        %c1_i32_135 = arith.constant 1 : i32
        %c0_i32_136 = arith.constant 0 : i32
        %235 = tpu.memref_slice %arg4[%229, %c0_i32_136] : memref<64x128xf32, #tpu.memory_space<any>> -> memref<1x128xf32, #tpu.memory_space<any>>
        %c0_i32_137 = arith.constant 0 : i32
        %236 = tpu.memref_slice %arg8[%189, %c2_i32_131, %c0_i32_137] : memref<2x8x128xf32, #tpu.memory_space<vmem>> -> memref<1x1x128xf32, #tpu.memory_space<vmem>>
        %237 = tpu.memref_squeeze %236 : memref<1x1x128xf32, #tpu.memory_space<vmem>> -> memref<1x128xf32, #tpu.memory_space<vmem>>
        %238 = tpu.memref_slice %arg9[%c1_i32_135, %189] : memref<2x2x!tpu.dma_semaphore, #tpu.memory_space<semaphore_mem>> -> memref<1x1x!tpu.dma_semaphore, #tpu.memory_space<semaphore_mem>>
        %239 = tpu.memref_squeeze %238 : memref<1x1x!tpu.dma_semaphore, #tpu.memory_space<semaphore_mem>> -> memref<!tpu.dma_semaphore, #tpu.memory_space<semaphore_mem>>
        tpu.enqueue_dma source(%235 : memref<1x128xf32, #tpu.memory_space<any>>) target(%237 : memref<1x128xf32, #tpu.memory_space<vmem>>) target_semaphore(%239 : memref<!tpu.dma_semaphore, #tpu.memory_space<semaphore_mem>>)
        %c3_i32_138 = arith.constant 3 : i32
        %240 = arith.addi %191, %c3_i32_138 : i32
        %241 = arith.index_cast %240 : i32 to index
        %242 = memref.load %arg1[%241] : memref<32xi32, #tpu.memory_space<smem>>
        %243 = arith.addi %191, %c3_i32_138 : i32
        %244 = arith.index_cast %243 : i32 to index
        %245 = memref.load %arg2[%244] : memref<32xi32, #tpu.memory_space<smem>>
        %c0_i32_139 = arith.constant 0 : i32
        %c0_i32_140 = arith.constant 0 : i32
        %246 = tpu.memref_slice %arg3[%242, %c0_i32_140] : memref<64x128xf32, #tpu.memory_space<any>> -> memref<1x128xf32, #tpu.memory_space<any>>
        %c0_i32_141 = arith.constant 0 : i32
        %247 = tpu.memref_slice %arg7[%189, %c3_i32_138, %c0_i32_141] : memref<2x8x128xf32, #tpu.memory_space<vmem>> -> memref<1x1x128xf32, #tpu.memory_space<vmem>>
        %248 = tpu.memref_squeeze %247 : memref<1x1x128xf32, #tpu.memory_space<vmem>> -> memref<1x128xf32, #tpu.memory_space<vmem>>
        %249 = tpu.memref_slice %arg9[%c0_i32_139, %189] : memref<2x2x!tpu.dma_semaphore, #tpu.memory_space<semaphore_mem>> -> memref<1x1x!tpu.dma_semaphore, #tpu.memory_space<semaphore_mem>>
        %250 = tpu.memref_squeeze %249 : memref<1x1x!tpu.dma_semaphore, #tpu.memory_space<semaphore_mem>> -> memref<!tpu.dma_semaphore, #tpu.memory_space<semaphore_mem>>
        tpu.enqueue_dma source(%246 : memref<1x128xf32, #tpu.memory_space<any>>) target(%248 : memref<1x128xf32, #tpu.memory_space<vmem>>) target_semaphore(%250 : memref<!tpu.dma_semaphore, #tpu.memory_space<semaphore_mem>>)
        %c1_i32_142 = arith.constant 1 : i32
        %c0_i32_143 = arith.constant 0 : i32
        %251 = tpu.memref_slice %arg4[%245, %c0_i32_143] : memref<64x128xf32, #tpu.memory_space<any>> -> memref<1x128xf32, #tpu.memory_space<any>>
        %c0_i32_144 = arith.constant 0 : i32
        %252 = tpu.memref_slice %arg8[%189, %c3_i32_138, %c0_i32_144] : memref<2x8x128xf32, #tpu.memory_space<vmem>> -> memref<1x1x128xf32, #tpu.memory_space<vmem>>
        %253 = tpu.memref_squeeze %252 : memref<1x1x128xf32, #tpu.memory_space<vmem>> -> memref<1x128xf32, #tpu.memory_space<vmem>>
        %254 = tpu.memref_slice %arg9[%c1_i32_142, %189] : memref<2x2x!tpu.dma_semaphore, #tpu.memory_space<semaphore_mem>> -> memref<1x1x!tpu.dma_semaphore, #tpu.memory_space<semaphore_mem>>
        %255 = tpu.memref_squeeze %254 : memref<1x1x!tpu.dma_semaphore, #tpu.memory_space<semaphore_mem>> -> memref<!tpu.dma_semaphore, #tpu.memory_space<semaphore_mem>>
        tpu.enqueue_dma source(%251 : memref<1x128xf32, #tpu.memory_space<any>>) target(%253 : memref<1x128xf32, #tpu.memory_space<vmem>>) target_semaphore(%255 : memref<!tpu.dma_semaphore, #tpu.memory_space<semaphore_mem>>)
        %c4_i32_145 = arith.constant 4 : i32
        %256 = arith.addi %191, %c4_i32_145 : i32
        %257 = arith.index_cast %256 : i32 to index
        %258 = memref.load %arg1[%257] : memref<32xi32, #tpu.memory_space<smem>>
        %259 = arith.addi %191, %c4_i32_145 : i32
        %260 = arith.index_cast %259 : i32 to index
        %261 = memref.load %arg2[%260] : memref<32xi32, #tpu.memory_space<smem>>
        %c0_i32_146 = arith.constant 0 : i32
        %c0_i32_147 = arith.constant 0 : i32
        %262 = tpu.memref_slice %arg3[%258, %c0_i32_147] : memref<64x128xf32, #tpu.memory_space<any>> -> memref<1x128xf32, #tpu.memory_space<any>>
        %c0_i32_148 = arith.constant 0 : i32
        %263 = tpu.memref_slice %arg7[%189, %c4_i32_145, %c0_i32_148] : memref<2x8x128xf32, #tpu.memory_space<vmem>> -> memref<1x1x128xf32, #tpu.memory_space<vmem>>
        %264 = tpu.memref_squeeze %263 : memref<1x1x128xf32, #tpu.memory_space<vmem>> -> memref<1x128xf32, #tpu.memory_space<vmem>>
        %265 = tpu.memref_slice %arg9[%c0_i32_146, %189] : memref<2x2x!tpu.dma_semaphore, #tpu.memory_space<semaphore_mem>> -> memref<1x1x!tpu.dma_semaphore, #tpu.memory_space<semaphore_mem>>
        %266 = tpu.memref_squeeze %265 : memref<1x1x!tpu.dma_semaphore, #tpu.memory_space<semaphore_mem>> -> memref<!tpu.dma_semaphore, #tpu.memory_space<semaphore_mem>>
        tpu.enqueue_dma source(%262 : memref<1x128xf32, #tpu.memory_space<any>>) target(%264 : memref<1x128xf32, #tpu.memory_space<vmem>>) target_semaphore(%266 : memref<!tpu.dma_semaphore, #tpu.memory_space<semaphore_mem>>)
        %c1_i32_149 = arith.constant 1 : i32
        %c0_i32_150 = arith.constant 0 : i32
        %267 = tpu.memref_slice %arg4[%261, %c0_i32_150] : memref<64x128xf32, #tpu.memory_space<any>> -> memref<1x128xf32, #tpu.memory_space<any>>
        %c0_i32_151 = arith.constant 0 : i32
        %268 = tpu.memref_slice %arg8[%189, %c4_i32_145, %c0_i32_151] : memref<2x8x128xf32, #tpu.memory_space<vmem>> -> memref<1x1x128xf32, #tpu.memory_space<vmem>>
        %269 = tpu.memref_squeeze %268 : memref<1x1x128xf32, #tpu.memory_space<vmem>> -> memref<1x128xf32, #tpu.memory_space<vmem>>
        %270 = tpu.memref_slice %arg9[%c1_i32_149, %189] : memref<2x2x!tpu.dma_semaphore, #tpu.memory_space<semaphore_mem>> -> memref<1x1x!tpu.dma_semaphore, #tpu.memory_space<semaphore_mem>>
        %271 = tpu.memref_squeeze %270 : memref<1x1x!tpu.dma_semaphore, #tpu.memory_space<semaphore_mem>> -> memref<!tpu.dma_semaphore, #tpu.memory_space<semaphore_mem>>
        tpu.enqueue_dma source(%267 : memref<1x128xf32, #tpu.memory_space<any>>) target(%269 : memref<1x128xf32, #tpu.memory_space<vmem>>) target_semaphore(%271 : memref<!tpu.dma_semaphore, #tpu.memory_space<semaphore_mem>>)
        %c5_i32_152 = arith.constant 5 : i32
        %272 = arith.addi %191, %c5_i32_152 : i32
        %273 = arith.index_cast %272 : i32 to index
        %274 = memref.load %arg1[%273] : memref<32xi32, #tpu.memory_space<smem>>
        %275 = arith.addi %191, %c5_i32_152 : i32
        %276 = arith.index_cast %275 : i32 to index
        %277 = memref.load %arg2[%276] : memref<32xi32, #tpu.memory_space<smem>>
        %c0_i32_153 = arith.constant 0 : i32
        %c0_i32_154 = arith.constant 0 : i32
        %278 = tpu.memref_slice %arg3[%274, %c0_i32_154] : memref<64x128xf32, #tpu.memory_space<any>> -> memref<1x128xf32, #tpu.memory_space<any>>
        %c0_i32_155 = arith.constant 0 : i32
        %279 = tpu.memref_slice %arg7[%189, %c5_i32_152, %c0_i32_155] : memref<2x8x128xf32, #tpu.memory_space<vmem>> -> memref<1x1x128xf32, #tpu.memory_space<vmem>>
        %280 = tpu.memref_squeeze %279 : memref<1x1x128xf32, #tpu.memory_space<vmem>> -> memref<1x128xf32, #tpu.memory_space<vmem>>
        %281 = tpu.memref_slice %arg9[%c0_i32_153, %189] : memref<2x2x!tpu.dma_semaphore, #tpu.memory_space<semaphore_mem>> -> memref<1x1x!tpu.dma_semaphore, #tpu.memory_space<semaphore_mem>>
        %282 = tpu.memref_squeeze %281 : memref<1x1x!tpu.dma_semaphore, #tpu.memory_space<semaphore_mem>> -> memref<!tpu.dma_semaphore, #tpu.memory_space<semaphore_mem>>
        tpu.enqueue_dma source(%278 : memref<1x128xf32, #tpu.memory_space<any>>) target(%280 : memref<1x128xf32, #tpu.memory_space<vmem>>) target_semaphore(%282 : memref<!tpu.dma_semaphore, #tpu.memory_space<semaphore_mem>>)
        %c1_i32_156 = arith.constant 1 : i32
        %c0_i32_157 = arith.constant 0 : i32
        %283 = tpu.memref_slice %arg4[%277, %c0_i32_157] : memref<64x128xf32, #tpu.memory_space<any>> -> memref<1x128xf32, #tpu.memory_space<any>>
        %c0_i32_158 = arith.constant 0 : i32
        %284 = tpu.memref_slice %arg8[%189, %c5_i32_152, %c0_i32_158] : memref<2x8x128xf32, #tpu.memory_space<vmem>> -> memref<1x1x128xf32, #tpu.memory_space<vmem>>
        %285 = tpu.memref_squeeze %284 : memref<1x1x128xf32, #tpu.memory_space<vmem>> -> memref<1x128xf32, #tpu.memory_space<vmem>>
        %286 = tpu.memref_slice %arg9[%c1_i32_156, %189] : memref<2x2x!tpu.dma_semaphore, #tpu.memory_space<semaphore_mem>> -> memref<1x1x!tpu.dma_semaphore, #tpu.memory_space<semaphore_mem>>
        %287 = tpu.memref_squeeze %286 : memref<1x1x!tpu.dma_semaphore, #tpu.memory_space<semaphore_mem>> -> memref<!tpu.dma_semaphore, #tpu.memory_space<semaphore_mem>>
        tpu.enqueue_dma source(%283 : memref<1x128xf32, #tpu.memory_space<any>>) target(%285 : memref<1x128xf32, #tpu.memory_space<vmem>>) target_semaphore(%287 : memref<!tpu.dma_semaphore, #tpu.memory_space<semaphore_mem>>)
        %c6_i32_159 = arith.constant 6 : i32
        %288 = arith.addi %191, %c6_i32_159 : i32
        %289 = arith.index_cast %288 : i32 to index
        %290 = memref.load %arg1[%289] : memref<32xi32, #tpu.memory_space<smem>>
        %291 = arith.addi %191, %c6_i32_159 : i32
        %292 = arith.index_cast %291 : i32 to index
        %293 = memref.load %arg2[%292] : memref<32xi32, #tpu.memory_space<smem>>
        %c0_i32_160 = arith.constant 0 : i32
        %c0_i32_161 = arith.constant 0 : i32
        %294 = tpu.memref_slice %arg3[%290, %c0_i32_161] : memref<64x128xf32, #tpu.memory_space<any>> -> memref<1x128xf32, #tpu.memory_space<any>>
        %c0_i32_162 = arith.constant 0 : i32
        %295 = tpu.memref_slice %arg7[%189, %c6_i32_159, %c0_i32_162] : memref<2x8x128xf32, #tpu.memory_space<vmem>> -> memref<1x1x128xf32, #tpu.memory_space<vmem>>
        %296 = tpu.memref_squeeze %295 : memref<1x1x128xf32, #tpu.memory_space<vmem>> -> memref<1x128xf32, #tpu.memory_space<vmem>>
        %297 = tpu.memref_slice %arg9[%c0_i32_160, %189] : memref<2x2x!tpu.dma_semaphore, #tpu.memory_space<semaphore_mem>> -> memref<1x1x!tpu.dma_semaphore, #tpu.memory_space<semaphore_mem>>
        %298 = tpu.memref_squeeze %297 : memref<1x1x!tpu.dma_semaphore, #tpu.memory_space<semaphore_mem>> -> memref<!tpu.dma_semaphore, #tpu.memory_space<semaphore_mem>>
        tpu.enqueue_dma source(%294 : memref<1x128xf32, #tpu.memory_space<any>>) target(%296 : memref<1x128xf32, #tpu.memory_space<vmem>>) target_semaphore(%298 : memref<!tpu.dma_semaphore, #tpu.memory_space<semaphore_mem>>)
        %c1_i32_163 = arith.constant 1 : i32
        %c0_i32_164 = arith.constant 0 : i32
        %299 = tpu.memref_slice %arg4[%293, %c0_i32_164] : memref<64x128xf32, #tpu.memory_space<any>> -> memref<1x128xf32, #tpu.memory_space<any>>
        %c0_i32_165 = arith.constant 0 : i32
        %300 = tpu.memref_slice %arg8[%189, %c6_i32_159, %c0_i32_165] : memref<2x8x128xf32, #tpu.memory_space<vmem>> -> memref<1x1x128xf32, #tpu.memory_space<vmem>>
        %301 = tpu.memref_squeeze %300 : memref<1x1x128xf32, #tpu.memory_space<vmem>> -> memref<1x128xf32, #tpu.memory_space<vmem>>
        %302 = tpu.memref_slice %arg9[%c1_i32_163, %189] : memref<2x2x!tpu.dma_semaphore, #tpu.memory_space<semaphore_mem>> -> memref<1x1x!tpu.dma_semaphore, #tpu.memory_space<semaphore_mem>>
        %303 = tpu.memref_squeeze %302 : memref<1x1x!tpu.dma_semaphore, #tpu.memory_space<semaphore_mem>> -> memref<!tpu.dma_semaphore, #tpu.memory_space<semaphore_mem>>
        tpu.enqueue_dma source(%299 : memref<1x128xf32, #tpu.memory_space<any>>) target(%301 : memref<1x128xf32, #tpu.memory_space<vmem>>) target_semaphore(%303 : memref<!tpu.dma_semaphore, #tpu.memory_space<semaphore_mem>>)
        %c7_i32_166 = arith.constant 7 : i32
        %304 = arith.addi %191, %c7_i32_166 : i32
        %305 = arith.index_cast %304 : i32 to index
        %306 = memref.load %arg1[%305] : memref<32xi32, #tpu.memory_space<smem>>
        %307 = arith.addi %191, %c7_i32_166 : i32
        %308 = arith.index_cast %307 : i32 to index
        %309 = memref.load %arg2[%308] : memref<32xi32, #tpu.memory_space<smem>>
        %c0_i32_167 = arith.constant 0 : i32
        %c0_i32_168 = arith.constant 0 : i32
        %310 = tpu.memref_slice %arg3[%306, %c0_i32_168] : memref<64x128xf32, #tpu.memory_space<any>> -> memref<1x128xf32, #tpu.memory_space<any>>
        %c0_i32_169 = arith.constant 0 : i32
        %311 = tpu.memref_slice %arg7[%189, %c7_i32_166, %c0_i32_169] : memref<2x8x128xf32, #tpu.memory_space<vmem>> -> memref<1x1x128xf32, #tpu.memory_space<vmem>>
        %312 = tpu.memref_squeeze %311 : memref<1x1x128xf32, #tpu.memory_space<vmem>> -> memref<1x128xf32, #tpu.memory_space<vmem>>
        %313 = tpu.memref_slice %arg9[%c0_i32_167, %189] : memref<2x2x!tpu.dma_semaphore, #tpu.memory_space<semaphore_mem>> -> memref<1x1x!tpu.dma_semaphore, #tpu.memory_space<semaphore_mem>>
        %314 = tpu.memref_squeeze %313 : memref<1x1x!tpu.dma_semaphore, #tpu.memory_space<semaphore_mem>> -> memref<!tpu.dma_semaphore, #tpu.memory_space<semaphore_mem>>
        tpu.enqueue_dma source(%310 : memref<1x128xf32, #tpu.memory_space<any>>) target(%312 : memref<1x128xf32, #tpu.memory_space<vmem>>) target_semaphore(%314 : memref<!tpu.dma_semaphore, #tpu.memory_space<semaphore_mem>>)
        %c1_i32_170 = arith.constant 1 : i32
        %c0_i32_171 = arith.constant 0 : i32
        %315 = tpu.memref_slice %arg4[%309, %c0_i32_171] : memref<64x128xf32, #tpu.memory_space<any>> -> memref<1x128xf32, #tpu.memory_space<any>>
        %c0_i32_172 = arith.constant 0 : i32
        %316 = tpu.memref_slice %arg8[%189, %c7_i32_166, %c0_i32_172] : memref<2x8x128xf32, #tpu.memory_space<vmem>> -> memref<1x1x128xf32, #tpu.memory_space<vmem>>
        %317 = tpu.memref_squeeze %316 : memref<1x1x128xf32, #tpu.memory_space<vmem>> -> memref<1x128xf32, #tpu.memory_space<vmem>>
        %318 = tpu.memref_slice %arg9[%c1_i32_170, %189] : memref<2x2x!tpu.dma_semaphore, #tpu.memory_space<semaphore_mem>> -> memref<1x1x!tpu.dma_semaphore, #tpu.memory_space<semaphore_mem>>
        %319 = tpu.memref_squeeze %318 : memref<1x1x!tpu.dma_semaphore, #tpu.memory_space<semaphore_mem>> -> memref<!tpu.dma_semaphore, #tpu.memory_space<semaphore_mem>>
        tpu.enqueue_dma source(%315 : memref<1x128xf32, #tpu.memory_space<any>>) target(%317 : memref<1x128xf32, #tpu.memory_space<vmem>>) target_semaphore(%319 : memref<!tpu.dma_semaphore, #tpu.memory_space<semaphore_mem>>)
        %c8_i32_173 = arith.constant 8 : i32
      } else {
      }
      %c0_i32_97 = arith.constant 0 : i32
      %c0_i32_98 = arith.constant 0 : i32
      %c0_i32_99 = arith.constant 0 : i32
      %153 = tpu.memref_slice %arg7[%148, %c0_i32_98, %c0_i32_99] : memref<2x8x128xf32, #tpu.memory_space<vmem>> -> memref<1x8x128xf32, #tpu.memory_space<vmem>>
      %154 = tpu.memref_squeeze %153 : memref<1x8x128xf32, #tpu.memory_space<vmem>> -> memref<8x128xf32, #tpu.memory_space<vmem>>
      %c0_i32_100 = arith.constant 0 : i32
      %c0_i32_101 = arith.constant 0 : i32
      %155 = tpu.memref_slice %arg7[%148, %c0_i32_100, %c0_i32_101] : memref<2x8x128xf32, #tpu.memory_space<vmem>> -> memref<1x8x128xf32, #tpu.memory_space<vmem>>
      %156 = tpu.memref_squeeze %155 : memref<1x8x128xf32, #tpu.memory_space<vmem>> -> memref<8x128xf32, #tpu.memory_space<vmem>>
      %157 = tpu.memref_slice %arg9[%c0_i32_97, %148] : memref<2x2x!tpu.dma_semaphore, #tpu.memory_space<semaphore_mem>> -> memref<1x1x!tpu.dma_semaphore, #tpu.memory_space<semaphore_mem>>
      %158 = tpu.memref_squeeze %157 : memref<1x1x!tpu.dma_semaphore, #tpu.memory_space<semaphore_mem>> -> memref<!tpu.dma_semaphore, #tpu.memory_space<semaphore_mem>>
      tpu.wait_dma2 semaphore(%158 : memref<!tpu.dma_semaphore, #tpu.memory_space<semaphore_mem>>) src(%154 : memref<8x128xf32, #tpu.memory_space<vmem>>) dst(%156 : memref<8x128xf32, #tpu.memory_space<vmem>>)
      %c1_i32_102 = arith.constant 1 : i32
      %c0_i32_103 = arith.constant 0 : i32
      %c0_i32_104 = arith.constant 0 : i32
      %159 = tpu.memref_slice %arg8[%148, %c0_i32_103, %c0_i32_104] : memref<2x8x128xf32, #tpu.memory_space<vmem>> -> memref<1x8x128xf32, #tpu.memory_space<vmem>>
      %160 = tpu.memref_squeeze %159 : memref<1x8x128xf32, #tpu.memory_space<vmem>> -> memref<8x128xf32, #tpu.memory_space<vmem>>
      %c0_i32_105 = arith.constant 0 : i32
      %c0_i32_106 = arith.constant 0 : i32
      %161 = tpu.memref_slice %arg8[%148, %c0_i32_105, %c0_i32_106] : memref<2x8x128xf32, #tpu.memory_space<vmem>> -> memref<1x8x128xf32, #tpu.memory_space<vmem>>
      %162 = tpu.memref_squeeze %161 : memref<1x8x128xf32, #tpu.memory_space<vmem>> -> memref<8x128xf32, #tpu.memory_space<vmem>>
      %163 = tpu.memref_slice %arg9[%c1_i32_102, %148] : memref<2x2x!tpu.dma_semaphore, #tpu.memory_space<semaphore_mem>> -> memref<1x1x!tpu.dma_semaphore, #tpu.memory_space<semaphore_mem>>
      %164 = tpu.memref_squeeze %163 : memref<1x1x!tpu.dma_semaphore, #tpu.memory_space<semaphore_mem>> -> memref<!tpu.dma_semaphore, #tpu.memory_space<semaphore_mem>>
      tpu.wait_dma2 semaphore(%164 : memref<!tpu.dma_semaphore, #tpu.memory_space<semaphore_mem>>) src(%160 : memref<8x128xf32, #tpu.memory_space<vmem>>) dst(%162 : memref<8x128xf32, #tpu.memory_space<vmem>>)
      %165 = arith.index_cast %148 : i32 to index
      %c0_107 = arith.constant 0 : index
      %c0_108 = arith.constant 0 : index
      %166 = vector.load %arg7[%165, %c0_107, %c0_108] : memref<2x8x128xf32, #tpu.memory_space<vmem>>, vector<1x8x128xf32>
      %167 = vector.shape_cast %166 : vector<1x8x128xf32> to vector<8x128xf32>
      %168 = arith.index_cast %148 : i32 to index
      %c0_109 = arith.constant 0 : index
      %c0_110 = arith.constant 0 : index
      %169 = vector.load %arg8[%168, %c0_109, %c0_110] : memref<2x8x128xf32, #tpu.memory_space<vmem>>, vector<1x8x128xf32>
      %170 = vector.shape_cast %169 : vector<1x8x128xf32> to vector<8x128xf32>
      %171 = arith.mulf %167, %170 : vector<8x128xf32>
      %cst_111 = arith.constant dense<0.000000e+00> : vector<8xf32>
      %172 = vector.multi_reduction <add>, %171, %cst_111 [1] : vector<8x128xf32> to vector<8xf32>
      %173 = vector.shape_cast %172 : vector<8xf32> to vector<8x1xf32>
      %c8_i32_112 = arith.constant 8 : i32
      %174 = arith.muli %arg10, %c8_i32_112 : i32
      %175 = tpu.assume_multiple %174, 8 : i32
      %176 = arith.index_cast %175 : i32 to index
      %c0_113 = arith.constant 0 : index
      %177 = vector.load %arg5[%176, %c0_113] : memref<16x4xf32, #tpu.memory_space<vmem>>, vector<8x4xf32>
      %178 = vector.extract_strided_slice %177 {offsets = [0, 0], sizes = [8, 1], strides = [1, 1]} : vector<8x4xf32> to vector<8x1xf32>
      %179 = arith.addf %173, %178 : vector<8x1xf32>
      %180 = vector.extract_strided_slice %177 {offsets = [0, 1], sizes = [8, 1], strides = [1, 1]} : vector<8x4xf32> to vector<8x1xf32>
      %181 = arith.addf %179, %180 : vector<8x1xf32>
      %182 = vector.extract_strided_slice %177 {offsets = [0, 2], sizes = [8, 1], strides = [1, 1]} : vector<8x4xf32> to vector<8x1xf32>
      %183 = arith.subf %181, %182 : vector<8x1xf32>
      %184 = vector.extract_strided_slice %177 {offsets = [0, 3], sizes = [8, 1], strides = [1, 1]} : vector<8x4xf32> to vector<8x1xf32>
      %185 = arith.mulf %184, %183 : vector<8x1xf32>
      %186 = arith.mulf %185, %183 : vector<8x1xf32>
      %187 = arith.addf %arg11, %186 : vector<8x1xf32>
      scf.yield %187 : vector<8x1xf32>
    }
    %c2_i32_84 = arith.constant 2 : i32
    %133 = vector.shape_cast %132 : vector<8x1xf32> to vector<1x8x1xf32>
    %cst_85 = arith.constant dense<0.000000e+00> : vector<1xf32>
    %134 = vector.multi_reduction <add>, %133, %cst_85 [1, 2] : vector<1x8x1xf32> to vector<1xf32>
    %135 = vector.shape_cast %134 : vector<1xf32> to vector<1x1x1xf32>
    %136 = vector.extract %135[0, 0, 0] : f32 from vector<1x1x1xf32>
    %137 = vector.broadcast %136 : f32 to vector<1x8x128xf32>
    %c0 = arith.constant 0 : index
    %c0_86 = arith.constant 0 : index
    %c0_87 = arith.constant 0 : index
    %138 = vector.load %arg6[%c0, %c0_86, %c0_87] : memref<1x8x128xf32, #tpu.memory_space<vmem>>, vector<1x8x128xf32>
    tpu.vector_store %arg6[%c0, %c0_86, %c0_87], %137 {strides = array<i32>} : memref<1x8x128xf32, #tpu.memory_space<vmem>>, vector<1x8x128xf32>,
    return
  }
  func.func @transform_2(%arg0: i32, %arg1: memref<32xi32, #tpu.memory_space<smem>>, %arg2: memref<32xi32, #tpu.memory_space<smem>>) -> (i32, i32) {
    %c0_i32 = arith.constant 0 : i32
    %c0_i32_0 = arith.constant 0 : i32
    return %arg0, %c0_i32 : i32, i32
  }
  func.func @transform_3(%arg0: i32, %arg1: memref<32xi32, #tpu.memory_space<smem>>, %arg2: memref<32xi32, #tpu.memory_space<smem>>) -> (i32, i32, i32) {
    %c0_i32 = arith.constant 0 : i32
    %c0_i32_0 = arith.constant 0 : i32
    %c0_i32_1 = arith.constant 0 : i32
    return %arg0, %c0_i32, %c0_i32_0 : i32, i32, i32
  }
}

</mosaic_0001>

<llo_original>
// kernel: tpu_custom_call.1
$region0: #{tpu_custom_call.1}
  #allocation0 [shape = 'u32[]', space=smem, size = 0x4, offset = 0x4, fixed_abs, tag = 'smem constant byte address 0x4 - core index']
  #allocation1 [shape = 'u32[144,128]{1,0:T(1,128)}', space=vmem, size = 0x12000, scoped, tag = 'internal scratch']
  #allocation2 [shape = 'f32[2,8,128]{2,1,0:T(8,128)}', space=vmem, size = 0x2000, scoped, tag = 'scratch operand']
  #allocation3 [shape = 'f32[2,8,128]{2,1,0:T(8,128)}', space=vmem, size = 0x2000, scoped, tag = 'scratch operand']
  #allocation4 [shape = 's32[4]{0}', space=sflag, size = 0x10, scoped, tag = 'scratch operand']
  #allocation5 [shape = 's32[1]{0}', space=sflag, size = 0x4, scoped, tag = 'scoped memory for tpu_custom_call.1']
  #allocation6 [shape = 'u8[512]{0}', space=smem, size = 0x200, scoped, tag = 'prefetched SMEM operand 0']
  #allocation7 [shape = 'u8[512]{0}', space=smem, size = 0x200, scoped, tag = 'prefetched SMEM operand 1']
  #allocation10 [shape = 's32[]', space=sflag, size = 0x4, offset = 0, fixed_abs, tag = 'sflag constant byte address 0x0 - dummy sync flag']
  #allocation11 [shape = 's32[]', space=sflag, size = 0x4, offset = 0, fixed_abs, tag = 'sflag constant byte address 0x0 - dummy sync flag']
  #allocation12 [shape = 'u32[]', space=smem, size = 0x4, offset = 0x44, fixed_abs, tag = 'smem constant byte address 0x44 - assertion arg 0']
  #allocation13 [shape = 'u32[]', space=smem, size = 0x4, offset = 0x48, fixed_abs, tag = 'smem constant byte address 0x48 - assertion arg 1']
  #allocation14 [shape = 's32[]', space=sflag, size = 0x4, offset = 0, fixed_abs, tag = 'sflag constant byte address 0x0 - dummy sync flag']
  #allocation15 [shape = 's32[]', space=sflag, size = 0x4, offset = 0, fixed_abs, tag = 'sflag constant byte address 0x0 - dummy sync flag']
  #allocation16 [shape = 's32[]', space=sflag, size = 0x4, offset = 0, fixed_abs, tag = 'sflag constant byte address 0x0 - dummy sync flag']
  #allocation17 [shape = 's32[]', space=sflag, size = 0x4, offset = 0, fixed_abs, tag = 'sflag constant byte address 0x0 - dummy sync flag']
  #allocation18 [shape = 's32[]', space=sflag, size = 0x4, offset = 0, fixed_abs, tag = 'sflag constant byte address 0x0 - dummy sync flag']
  #allocation19 [shape = 's32[]', space=sflag, size = 0x4, offset = 0, fixed_abs, tag = 'sflag constant byte address 0x0 - dummy sync flag']
  #allocation20 [shape = 's32[]', space=sflag, size = 0x4, offset = 0, fixed_abs, tag = 'sflag constant byte address 0x0 - dummy sync flag']
  #allocation21 [shape = 's32[]', space=sflag, size = 0x4, offset = 0, fixed_abs, tag = 'sflag constant byte address 0x0 - dummy sync flag']
  #allocation22 [shape = 's32[]', space=sflag, size = 0x4, offset = 0, fixed_abs, tag = 'sflag constant byte address 0x0 - dummy sync flag']
  #allocation23 [shape = 's32[]', space=sflag, size = 0x4, offset = 0, fixed_abs, tag = 'sflag constant byte address 0x0 - dummy sync flag']
  #allocation24 [shape = 's32[]', space=sflag, size = 0x4, offset = 0, fixed_abs, tag = 'sflag constant byte address 0x0 - dummy sync flag']
  #allocation25 [shape = 's32[]', space=sflag, size = 0x4, offset = 0, fixed_abs, tag = 'sflag constant byte address 0x0 - dummy sync flag']
  #allocation26 [shape = 's32[]', space=sflag, size = 0x4, offset = 0, fixed_abs, tag = 'sflag constant byte address 0x0 - dummy sync flag']
  #allocation27 [shape = 's32[]', space=sflag, size = 0x4, offset = 0, fixed_abs, tag = 'sflag constant byte address 0x0 - dummy sync flag']
  #allocation28 [shape = 's32[]', space=sflag, size = 0x4, offset = 0, fixed_abs, tag = 'sflag constant byte address 0x0 - dummy sync flag']
  #allocation29 [shape = 's32[]', space=sflag, size = 0x4, offset = 0, fixed_abs, tag = 'sflag constant byte address 0x0 - dummy sync flag']
  #allocation30 [shape = 's32[]', space=sflag, size = 0x4, offset = 0, fixed_abs, tag = 'sflag constant byte address 0x0 - dummy sync flag']
  #allocation31 [shape = 's32[]', space=sflag, size = 0x4, offset = 0, fixed_abs, tag = 'sflag constant byte address 0x0 - dummy sync flag']
  #allocation32 [shape = 's32[]', space=sflag, size = 0x4, offset = 0, fixed_abs, tag = 'sflag constant byte address 0x0 - dummy sync flag']
  #allocation33 [shape = 's32[]', space=sflag, size = 0x4, offset = 0, fixed_abs, tag = 'sflag constant byte address 0x0 - dummy sync flag']
  #allocation34 [shape = 's32[]', space=sflag, size = 0x4, offset = 0, fixed_abs, tag = 'sflag constant byte address 0x0 - dummy sync flag']
  #allocation35 [shape = 's32[]', space=sflag, size = 0x4, offset = 0, fixed_abs, tag = 'sflag constant byte address 0x0 - dummy sync flag']
  #allocation36 [shape = 's32[]', space=sflag, size = 0x4, offset = 0, fixed_abs, tag = 'sflag constant byte address 0x0 - dummy sync flag']
  #allocation37 [shape = 's32[]', space=sflag, size = 0x4, offset = 0, fixed_abs, tag = 'sflag constant byte address 0x0 - dummy sync flag']
  #allocation38 [shape = 's32[]', space=sflag, size = 0x4, offset = 0, fixed_abs, tag = 'sflag constant byte address 0x0 - dummy sync flag']
  #allocation39 [shape = 's32[]', space=sflag, size = 0x4, offset = 0, fixed_abs, tag = 'sflag constant byte address 0x0 - dummy sync flag']
  #allocation40 [shape = 's32[]', space=sflag, size = 0x4, offset = 0, fixed_abs, tag = 'sflag constant byte address 0x0 - dummy sync flag']
  #allocation41 [shape = 's32[]', space=sflag, size = 0x4, offset = 0, fixed_abs, tag = 'sflag constant byte address 0x0 - dummy sync flag']
  #allocation42 [shape = 's32[]', space=sflag, size = 0x4, offset = 0, fixed_abs, tag = 'sflag constant byte address 0x0 - dummy sync flag']
  #allocation43 [shape = 's32[]', space=sflag, size = 0x4, offset = 0, fixed_abs, tag = 'sflag constant byte address 0x0 - dummy sync flag']
  #allocation44 [shape = 's32[]', space=sflag, size = 0x4, offset = 0, fixed_abs, tag = 'sflag constant byte address 0x0 - dummy sync flag']
  #allocation45 [shape = 's32[]', space=sflag, size = 0x4, offset = 0, fixed_abs, tag = 'sflag constant byte address 0x0 - dummy sync flag']
  #allocation46 [shape = 's32[]', space=sflag, size = 0x4, offset = 0, fixed_abs, tag = 'sflag constant byte address 0x0 - dummy sync flag']
  #allocation47 [shape = 's32[]', space=sflag, size = 0x4, offset = 0, fixed_abs, tag = 'sflag constant byte address 0x0 - dummy sync flag']
  #allocation48 [shape = 's32[]', space=sflag, size = 0x4, offset = 0, fixed_abs, tag = 'sflag constant byte address 0x0 - dummy sync flag']
  #allocation49 [shape = 's32[]', space=sflag, size = 0x4, offset = 0, fixed_abs, tag = 'sflag constant byte address 0x0 - dummy sync flag']
  #allocation50 [shape = 's32[]', space=sflag, size = 0x4, offset = 0, fixed_abs, tag = 'sflag constant byte address 0x0 - dummy sync flag']
  #allocation51 [shape = 's32[]', space=sflag, size = 0x4, offset = 0, fixed_abs, tag = 'sflag constant byte address 0x0 - dummy sync flag']
  #allocation52 [shape = 's32[]', space=sflag, size = 0x4, offset = 0, fixed_abs, tag = 'sflag constant byte address 0x0 - dummy sync flag']
  #allocation53 [shape = 's32[]', space=sflag, size = 0x4, offset = 0, fixed_abs, tag = 'sflag constant byte address 0x0 - dummy sync flag']
  #allocation54 [shape = 's32[]', space=sflag, size = 0x4, offset = 0, fixed_abs, tag = 'sflag constant byte address 0x0 - dummy sync flag']
  #allocation55 [shape = 's32[]', space=sflag, size = 0x4, offset = 0, fixed_abs, tag = 'sflag constant byte address 0x0 - dummy sync flag']
  #allocation56 [shape = 's32[]', space=sflag, size = 0x4, offset = 0, fixed_abs, tag = 'sflag constant byte address 0x0 - dummy sync flag']
  #allocation57 [shape = 's32[]', space=sflag, size = 0x4, offset = 0, fixed_abs, tag = 'sflag constant byte address 0x0 - dummy sync flag']
  #allocation58 [shape = 's32[]', space=sflag, size = 0x4, offset = 0, fixed_abs, tag = 'sflag constant byte address 0x0 - dummy sync flag']
  #allocation59 [shape = 's32[]', space=sflag, size = 0x4, offset = 0, fixed_abs, tag = 'sflag constant byte address 0x0 - dummy sync flag']
  #allocation60 [shape = 's32[]', space=sflag, size = 0x4, offset = 0, fixed_abs, tag = 'sflag constant byte address 0x0 - dummy sync flag']
  #allocation61 [shape = 's32[]', space=sflag, size = 0x4, offset = 0, fixed_abs, tag = 'sflag constant byte address 0x0 - dummy sync flag']
  #allocation62 [shape = 's32[]', space=sflag, size = 0x4, offset = 0, fixed_abs, tag = 'sflag constant byte address 0x0 - dummy sync flag']
  #allocation63 [shape = 's32[]', space=sflag, size = 0x4, offset = 0, fixed_abs, tag = 'sflag constant byte address 0x0 - dummy sync flag']
  #allocation64 [shape = 's32[]', space=sflag, size = 0x4, offset = 0, fixed_abs, tag = 'sflag constant byte address 0x0 - dummy sync flag']
  #allocation65 [shape = 's32[]', space=sflag, size = 0x4, offset = 0, fixed_abs, tag = 'sflag constant byte address 0x0 - dummy sync flag']
  #allocation66 [shape = 's32[]', space=sflag, size = 0x4, offset = 0, fixed_abs, tag = 'sflag constant byte address 0x0 - dummy sync flag']
  #allocation67 [shape = 's32[]', space=sflag, size = 0x4, offset = 0, fixed_abs, tag = 'sflag constant byte address 0x0 - dummy sync flag']
  #allocation68 [shape = 's32[]', space=sflag, size = 0x4, offset = 0, fixed_abs, tag = 'sflag constant byte address 0x0 - dummy sync flag']
  #allocation69 [shape = 's32[]', space=sflag, size = 0x4, offset = 0, fixed_abs, tag = 'sflag constant byte address 0x0 - dummy sync flag']
  #allocation70 [shape = 's32[]', space=sflag, size = 0x4, offset = 0, fixed_abs, tag = 'sflag constant byte address 0x0 - dummy sync flag']
  #allocation71 [shape = 's32[]', space=sflag, size = 0x4, offset = 0, fixed_abs, tag = 'sflag constant byte address 0x0 - dummy sync flag']
  #allocation72 [shape = 's32[]', space=sflag, size = 0x4, offset = 0, fixed_abs, tag = 'sflag constant byte address 0x0 - dummy sync flag']
  #allocation73 [shape = 's32[]', space=sflag, size = 0x4, offset = 0, fixed_abs, tag = 'sflag constant byte address 0x0 - dummy sync flag']
  #allocation74 [shape = 's32[]', space=sflag, size = 0x4, offset = 0, fixed_abs, tag = 'sflag constant byte address 0x0 - dummy sync flag']
  #allocation75 [shape = 's32[]', space=sflag, size = 0x4, offset = 0, fixed_abs, tag = 'sflag constant byte address 0x0 - dummy sync flag']
  %s0 = inlined_call_operand.vmem [shape: s32[32], index: 0, kind: input, shape index: {}]
  %s1 = inlined_call_operand.vmem [shape: s32[32], index: 1, kind: input, shape index: {}]
  %s2 = inlined_call_operand.hbm [shape: f32[64,128], index: 2, kind: input, shape index: {}]
  %s3 = inlined_call_operand.hbm [shape: f32[64,128], index: 3, kind: input, shape index: {}]
  %s4 = inlined_call_operand.vmem [shape: f32[32,4], index: 4, kind: input, shape index: {}]
  %s5 = inlined_call_operand.hbm [shape: f32[2,8,128], index: 5, kind: output, shape index: {}]
  %s6 = sld [smem:[#allocation0]]
  $region176: #{tpu_custom_call.1} parent=0
    _
  %s8 = ssub.s32 1, %s6
  %s9 = scalar_select 0, %s8, %s6
  %s10 = sshll.u32 %s0, 4
  %s11 = int_to_ptr.vmem [resolvable:$true] %s10
  %13 = dma.vmem_to_smem %s11, 16, [#allocation6], [#allocation5]
  %s14 = sshll.u32 %s1, 4
  %s15 = int_to_ptr.vmem [resolvable:$true] %s14
  %17 = dma.vmem_to_smem %s15, 16, [#allocation7], [#allocation5]
  %18 = dma.done [#allocation5], 32
  %19 = sfence
  $region1: #{tpu_custom_call.1} parent=0
    #allocation8 [shape = 'u8[8192]{0}', space=vmem, size = 0x2000, scoped, tag = 'output window, operand 0']
    #allocation9 [shape = 's32[2]{0}', space=sflag, size = 0x8, scoped, tag = 'scoped memory for tpu_custom_call.1']
    %20 = vsyncpa [#allocation9], 0
    %s21 = scalar_lea.sflag [#allocation9], 1
    %22 = vsyncpa %s21, 0
    loop: start=0, step=1, limit=4
    $region2: #{tpu_custom_call.1} parent=1 // loop_pre_header
      _
    $region3: #{tpu_custom_call.1} parent=1 // loop_header
      %s24 = sphi 0, %s28
      %p25 = scmp.ge.s32.totalorder %s24, 4
      %s34 = sphi 0, %s36
      %s37 = sphi 0, %s34
      %s38 = sphi 0, %s37
      %s54 = sphi 0, %s38
      %s60 = sphi 0, %s62
      %s63 = sphi 0, %s60
      %s64 = sphi 0, %s63
      %s80 = sphi 0, %s64
    $region4: #{tpu_custom_call.1} parent=1 // loop_header_branch
      %27 = sbr.rel (%p25) target = $region8
    $region5: #{tpu_custom_call.1} parent=1 // loop_body
      %s29 = ssub.s32 %s24, 1
      %s30 = ssub.s32 %s24, 2
      %s31 = sadd.s32 %s24, 1
      %s32 = ssub.s32 %s24, %s31
      %p33 = scmp.eq.s32.totalorder %s32, 0
      %s35 = sadd.s32 %s34, 1
      %s36 = scalar_select %p33, %s34, %s35
      %p39 = pneg %p33
      %p40 = scmp.eq.s32.totalorder %s24, 1
      %p41 = por %p39, %p40
      %p42 = scmp.ne.s32.totalorder %s34, %s37
      %p43 = scmp.eq.s32.totalorder %s24, 0
      %p44 = por %p42, %p43
      %p45 = scmp.ne.s32.totalorder %s34, %s37
      %p46 = scmp.eq.s32.totalorder %s29, 1
      %p47 = por %p45, %p46
      %p48 = scmp.ne.s32.totalorder %s37, %s38
      %p49 = scmp.eq.s32.totalorder %s29, 0
      %p50 = por %p48, %p49
      %p51 = scmp.ne.s32.totalorder %s37, %s38
      %p52 = scmp.eq.s32.totalorder %s30, 1
      %p53 = por %p51, %p52
      %p55 = scmp.ne.s32.totalorder %s38, %s54
      %p56 = scmp.eq.s32.totalorder %s30, 0
      %p57 = por %p55, %p56
      %s58 = ssub.s32 %s24, %s31
      %p59 = scmp.eq.s32.totalorder %s58, 0
      %s61 = sadd.s32 %s60, 1
      %s62 = scalar_select %p59, %s60, %s61
      %p65 = pneg %p59
      %p66 = scmp.eq.s32.totalorder %s24, 1
      %p67 = por %p65, %p66
      %p68 = scmp.ne.s32.totalorder %s60, %s63
      %p69 = scmp.eq.s32.totalorder %s24, 0
      %p70 = por %p68, %p69
      %p71 = scmp.ne.s32.totalorder %s60, %s63
      %p72 = scmp.eq.s32.totalorder %s29, 1
      %p73 = por %p71, %p72
      %p74 = scmp.ne.s32.totalorder %s63, %s64
      %p75 = scmp.eq.s32.totalorder %s29, 0
      %p76 = por %p74, %p75
      %p77 = scmp.ne.s32.totalorder %s63, %s64
      %p78 = scmp.eq.s32.totalorder %s30, 1
      %p79 = por %p77, %p78
      %p81 = scmp.ne.s32.totalorder %s64, %s80
      %p82 = scmp.eq.s32.totalorder %s30, 0
      %p83 = por %p81, %p82
      %p84 = scmp.le.s32.totalorder 1, %s24
      %p85 = scmp.lt.s32.totalorder %s24, 3
      %p86 = pnand %p84, %p85
      %p87 = pneg %p86
      // Predicated region
      $region9: #{tpu_custom_call.1} parent=5 // pred_check
        _
      $region10: #{tpu_custom_call.1} parent=5 // pred_check_branch
        %89 = sbr.rel (%p86) target = $region12
      $region11: #{tpu_custom_call.1} parent=5 // pred_region
        %s90 = ssub.s32 %s24, 1
      $region12: #{tpu_custom_call.1} parent=5 // pred_fallthru
        _
      %p91 = scmp.lt.s32.totalorder %s24, 2
      // Predicated region
      $region13: #{tpu_custom_call.1} parent=5 // pred_check
        %p92 = pneg %p91
      $region14: #{tpu_custom_call.1} parent=5 // pred_check_branch
        %94 = sbr.rel (%p92) target = $region16
      $region15: #{tpu_custom_call.1} parent=5 // pred_region
        // Predicated region
        $region17: #{tpu_custom_call.1} parent=15 // pred_check
          %p95 = pneg %p44
        $region18: #{tpu_custom_call.1} parent=15 // pred_check_branch
          %97 = sbr.rel (%p95) target = $region20
        $region19: #{tpu_custom_call.1} parent=15 // pred_region
          %s98 = smul.u32 2, %s24
          %p99 = scmp.lt.s32.totalorder %s98, 3
          %s100 = scalar_select %p99, %s98, 3
          %s101 = smul.addr %s100, 8
          %s102 = scalar_lea.vmem %s4, %s101
          %s103 = smul.u32 2, %s24
        $region20: #{tpu_custom_call.1} parent=15 // pred_fallthru
          _
      $region16: #{tpu_custom_call.1} parent=5 // pred_fallthru
        _
      %p104 = scmp.le.s32.totalorder 1, %s24
      %p105 = scmp.lt.s32.totalorder %s24, 3
      %p106 = pnand %p104, %p105
      %p107 = pneg %p106
      // Predicated region
      $region21: #{tpu_custom_call.1} parent=5 // pred_check
        _
      $region22: #{tpu_custom_call.1} parent=5 // pred_check_branch
        %109 = sbr.rel (%p106) target = $region24
      $region23: #{tpu_custom_call.1} parent=5 // pred_region
        %s110 = ssub.s32 %s24, 1
        %s111 = smul.u32 2, %s29
        %p112 = scmp.lt.s32.totalorder %s111, 3
        %s113 = scalar_select %p112, %s111, 3
        %s114 = smul.addr %s113, 8
        %s115 = scalar_lea.vmem %s4, %s114
        %p116 = pneg %p50
        %p117 = pneg %p47
        %p118 = pneg %p76
        %p119 = pneg %p73
        %s120 = sand.u32 %s63, 1
        %s121 = scalar_lea.sflag [#allocation9], %s120
        %s122 = sand.u32 %s63, 1
        %s123 = smul.addr %s122, 8
        %s124 = scalar_lea.vmem [#allocation8], %s123
        %s125 = smul.u32 2, %s29
        %p126 = scmp.lt.s32.totalorder %s125, 3
        %s127 = scalar_select %p126, %s125, 3
        %s128 = smul.addr %s127, 8
        %s129 = scalar_lea.vmem %s4, %s128
        %s130 = smul.u32 2, %s29
        %s131 = smul.u32 %s29, 16
        %s132 = sld [smem:[#allocation6 + %s131]]
        %s133 = sld [smem:[#allocation7 + %s131]]
        %s134 = smul.addr %s132, 16
        %s135 = scalar_lea.hbm %s2, %s134
        // Predicated region
        $region25: #{tpu_custom_call.1} parent=23 // pred_check
          _
        $region26: #{tpu_custom_call.1} parent=23 // pred_check_branch
          %137 = sbr.rel target = $region28
        $region27: #{tpu_custom_call.1} parent=23 // pred_region
          %138 = sst [smem:[#allocation12]] [#allocation11]
          %139 = sst [smem:[#allocation13]] [#allocation10]
        $region28: #{tpu_custom_call.1} parent=23 // pred_fallthru
          _
        %141 = shalt.err (0)
        %s143 = sshll.u32 [#allocation2], 4
        %s144 = int_to_ptr.vmem [resolvable:$true] %s143
        %146 = dma.hbm_to_vmem [thread:$0]  %s135, 16, %s144, [#allocation4]
        %s147 = smul.addr %s133, 16
        %s148 = scalar_lea.hbm %s3, %s147
        %s149 = scalar_lea.sflag [#allocation4], 2
        // Predicated region
        $region29: #{tpu_custom_call.1} parent=23 // pred_check
          _
        $region30: #{tpu_custom_call.1} parent=23 // pred_check_branch
          %151 = sbr.rel target = $region32
        $region31: #{tpu_custom_call.1} parent=23 // pred_region
          %152 = sst [smem:[#allocation12]] [#allocation15]
          %153 = sst [smem:[#allocation13]] [#allocation14]
        $region32: #{tpu_custom_call.1} parent=23 // pred_fallthru
          _
        %155 = shalt.err (0)
        %s157 = sshll.u32 [#allocation3], 4
        %s158 = int_to_ptr.vmem [resolvable:$true] %s157
        %160 = dma.hbm_to_vmem [thread:$0]  %s148, 16, %s158, %s149
        %s161 = sadd.s32 %s131, 1
        %s162 = sld [smem:[#allocation6 + %s161]]
        %s163 = sld [smem:[#allocation7 + %s161]]
        %s164 = smul.addr %s162, 16
        %s165 = scalar_lea.hbm %s2, %s164
        %s166 = scalar_lea.vmem [#allocation2], 1
        // Predicated region
        $region33: #{tpu_custom_call.1} parent=23 // pred_check
          _
        $region34: #{tpu_custom_call.1} parent=23 // pred_check_branch
          %168 = sbr.rel target = $region36
        $region35: #{tpu_custom_call.1} parent=23 // pred_region
          %169 = sst [smem:[#allocation12]] [#allocation17]
          %170 = sst [smem:[#allocation13]] [#allocation16]
        $region36: #{tpu_custom_call.1} parent=23 // pred_fallthru
          _
        %172 = shalt.err (0)
        %s174 = sshll.u32 %s166, 4
        %s175 = int_to_ptr.vmem [resolvable:$true] %s174
        %177 = dma.hbm_to_vmem [thread:$0]  %s165, 16, %s175, [#allocation4]
        %s178 = smul.addr %s163, 16
        %s179 = scalar_lea.hbm %s3, %s178
        %s180 = scalar_lea.vmem [#allocation3], 1
        // Predicated region
        $region37: #{tpu_custom_call.1} parent=23 // pred_check
          _
        $region38: #{tpu_custom_call.1} parent=23 // pred_check_branch
          %182 = sbr.rel target = $region40
        $region39: #{tpu_custom_call.1} parent=23 // pred_region
          %183 = sst [smem:[#allocation12]] [#allocation19]
          %184 = sst [smem:[#allocation13]] [#allocation18]
        $region40: #{tpu_custom_call.1} parent=23 // pred_fallthru
          _
        %186 = shalt.err (0)
        %s188 = sshll.u32 %s180, 4
        %s189 = int_to_ptr.vmem [resolvable:$true] %s188
        %191 = dma.hbm_to_vmem [thread:$0]  %s179, 16, %s189, %s149
        %s192 = sadd.s32 %s131, 2
        %s193 = sld [smem:[#allocation6 + %s192]]
        %s194 = sld [smem:[#allocation7 + %s192]]
        %s195 = smul.addr %s193, 16
        %s196 = scalar_lea.hbm %s2, %s195
        %s197 = scalar_lea.vmem [#allocation2], 2
        // Predicated region
        $region41: #{tpu_custom_call.1} parent=23 // pred_check
          _
        $region42: #{tpu_custom_call.1} parent=23 // pred_check_branch
          %199 = sbr.rel target = $region44
        $region43: #{tpu_custom_call.1} parent=23 // pred_region
          %200 = sst [smem:[#allocation12]] [#allocation21]
          %201 = sst [smem:[#allocation13]] [#allocation20]
        $region44: #{tpu_custom_call.1} parent=23 // pred_fallthru
          _
        %203 = shalt.err (0)
        %s205 = sshll.u32 %s197, 4
        %s206 = int_to_ptr.vmem [resolvable:$true] %s205
        %208 = dma.hbm_to_vmem [thread:$0]  %s196, 16, %s206, [#allocation4]
        %s209 = smul.addr %s194, 16
        %s210 = scalar_lea.hbm %s3, %s209
        %s211 = scalar_lea.vmem [#allocation3], 2
        // Predicated region
        $region45: #{tpu_custom_call.1} parent=23 // pred_check
          _
        $region46: #{tpu_custom_call.1} parent=23 // pred_check_branch
          %213 = sbr.rel target = $region48
        $region47: #{tpu_custom_call.1} parent=23 // pred_region
          %214 = sst [smem:[#allocation12]] [#allocation23]
          %215 = sst [smem:[#allocation13]] [#allocation22]
        $region48: #{tpu_custom_call.1} parent=23 // pred_fallthru
          _
        %217 = shalt.err (0)
        %s219 = sshll.u32 %s211, 4
        %s220 = int_to_ptr.vmem [resolvable:$true] %s219
        %222 = dma.hbm_to_vmem [thread:$0]  %s210, 16, %s220, %s149
        %s223 = sadd.s32 %s131, 3
        %s224 = sld [smem:[#allocation6 + %s223]]
        %s225 = sld [smem:[#allocation7 + %s223]]
        %s226 = smul.addr %s224, 16
        %s227 = scalar_lea.hbm %s2, %s226
        %s228 = scalar_lea.vmem [#allocation2], 3
        // Predicated region
        $region49: #{tpu_custom_call.1} parent=23 // pred_check
          _
        $region50: #{tpu_custom_call.1} parent=23 // pred_check_branch
          %230 = sbr.rel target = $region52
        $region51: #{tpu_custom_call.1} parent=23 // pred_region
          %231 = sst [smem:[#allocation12]] [#allocation25]
          %232 = sst [smem:[#allocation13]] [#allocation24]
        $region52: #{tpu_custom_call.1} parent=23 // pred_fallthru
          _
        %234 = shalt.err (0)
        %s236 = sshll.u32 %s228, 4
        %s237 = int_to_ptr.vmem [resolvable:$true] %s236
        %239 = dma.hbm_to_vmem [thread:$0]  %s227, 16, %s237, [#allocation4]
        %s240 = smul.addr %s225, 16
        %s241 = scalar_lea.hbm %s3, %s240
        %s242 = scalar_lea.vmem [#allocation3], 3
        // Predicated region
        $region53: #{tpu_custom_call.1} parent=23 // pred_check
          _
        $region54: #{tpu_custom_call.1} parent=23 // pred_check_branch
          %244 = sbr.rel target = $region56
        $region55: #{tpu_custom_call.1} parent=23 // pred_region
          %245 = sst [smem:[#allocation12]] [#allocation27]
          %246 = sst [smem:[#allocation13]] [#allocation26]
        $region56: #{tpu_custom_call.1} parent=23 // pred_fallthru
          _
        %248 = shalt.err (0)
        %s250 = sshll.u32 %s242, 4
        %s251 = int_to_ptr.vmem [resolvable:$true] %s250
        %253 = dma.hbm_to_vmem [thread:$0]  %s241, 16, %s251, %s149
        %s254 = sadd.s32 %s131, 4
        %s255 = sld [smem:[#allocation6 + %s254]]
        %s256 = sld [smem:[#allocation7 + %s254]]
        %s257 = smul.addr %s255, 16
        %s258 = scalar_lea.hbm %s2, %s257
        %s259 = scalar_lea.vmem [#allocation2], 4
        // Predicated region
        $region57: #{tpu_custom_call.1} parent=23 // pred_check
          _
        $region58: #{tpu_custom_call.1} parent=23 // pred_check_branch
          %261 = sbr.rel target = $region60
        $region59: #{tpu_custom_call.1} parent=23 // pred_region
          %262 = sst [smem:[#allocation12]] [#allocation29]
          %263 = sst [smem:[#allocation13]] [#allocation28]
        $region60: #{tpu_custom_call.1} parent=23 // pred_fallthru
          _
        %265 = shalt.err (0)
        %s267 = sshll.u32 %s259, 4
        %s268 = int_to_ptr.vmem [resolvable:$true] %s267
        %270 = dma.hbm_to_vmem [thread:$0]  %s258, 16, %s268, [#allocation4]
        %s271 = smul.addr %s256, 16
        %s272 = scalar_lea.hbm %s3, %s271
        %s273 = scalar_lea.vmem [#allocation3], 4
        // Predicated region
        $region61: #{tpu_custom_call.1} parent=23 // pred_check
          _
        $region62: #{tpu_custom_call.1} parent=23 // pred_check_branch
          %275 = sbr.rel target = $region64
        $region63: #{tpu_custom_call.1} parent=23 // pred_region
          %276 = sst [smem:[#allocation12]] [#allocation31]
          %277 = sst [smem:[#allocation13]] [#allocation30]
        $region64: #{tpu_custom_call.1} parent=23 // pred_fallthru
          _
        %279 = shalt.err (0)
        %s281 = sshll.u32 %s273, 4
        %s282 = int_to_ptr.vmem [resolvable:$true] %s281
        %284 = dma.hbm_to_vmem [thread:$0]  %s272, 16, %s282, %s149
        %s285 = sadd.s32 %s131, 5
        %s286 = sld [smem:[#allocation6 + %s285]]
        %s287 = sld [smem:[#allocation7 + %s285]]
        %s288 = smul.addr %s286, 16
        %s289 = scalar_lea.hbm %s2, %s288
        %s290 = scalar_lea.vmem [#allocation2], 5
        // Predicated region
        $region65: #{tpu_custom_call.1} parent=23 // pred_check
          _
        $region66: #{tpu_custom_call.1} parent=23 // pred_check_branch
          %292 = sbr.rel target = $region68
        $region67: #{tpu_custom_call.1} parent=23 // pred_region
          %293 = sst [smem:[#allocation12]] [#allocation33]
          %294 = sst [smem:[#allocation13]] [#allocation32]
        $region68: #{tpu_custom_call.1} parent=23 // pred_fallthru
          _
        %296 = shalt.err (0)
        %s298 = sshll.u32 %s290, 4
        %s299 = int_to_ptr.vmem [resolvable:$true] %s298
        %301 = dma.hbm_to_vmem [thread:$0]  %s289, 16, %s299, [#allocation4]
        %s302 = smul.addr %s287, 16
        %s303 = scalar_lea.hbm %s3, %s302
        %s304 = scalar_lea.vmem [#allocation3], 5
        // Predicated region
        $region69: #{tpu_custom_call.1} parent=23 // pred_check
          _
        $region70: #{tpu_custom_call.1} parent=23 // pred_check_branch
          %306 = sbr.rel target = $region72
        $region71: #{tpu_custom_call.1} parent=23 // pred_region
          %307 = sst [smem:[#allocation12]] [#allocation35]
          %308 = sst [smem:[#allocation13]] [#allocation34]
        $region72: #{tpu_custom_call.1} parent=23 // pred_fallthru
          _
        %310 = shalt.err (0)
        %s312 = sshll.u32 %s304, 4
        %s313 = int_to_ptr.vmem [resolvable:$true] %s312
        %315 = dma.hbm_to_vmem [thread:$0]  %s303, 16, %s313, %s149
        %s316 = sadd.s32 %s131, 6
        %s317 = sld [smem:[#allocation6 + %s316]]
        %s318 = sld [smem:[#allocation7 + %s316]]
        %s319 = smul.addr %s317, 16
        %s320 = scalar_lea.hbm %s2, %s319
        %s321 = scalar_lea.vmem [#allocation2], 6
        // Predicated region
        $region73: #{tpu_custom_call.1} parent=23 // pred_check
          _
        $region74: #{tpu_custom_call.1} parent=23 // pred_check_branch
          %323 = sbr.rel target = $region76
        $region75: #{tpu_custom_call.1} parent=23 // pred_region
          %324 = sst [smem:[#allocation12]] [#allocation37]
          %325 = sst [smem:[#allocation13]] [#allocation36]
        $region76: #{tpu_custom_call.1} parent=23 // pred_fallthru
          _
        %327 = shalt.err (0)
        %s329 = sshll.u32 %s321, 4
        %s330 = int_to_ptr.vmem [resolvable:$true] %s329
        %332 = dma.hbm_to_vmem [thread:$0]  %s320, 16, %s330, [#allocation4]
        %s333 = smul.addr %s318, 16
        %s334 = scalar_lea.hbm %s3, %s333
        %s335 = scalar_lea.vmem [#allocation3], 6
        // Predicated region
        $region77: #{tpu_custom_call.1} parent=23 // pred_check
          _
        $region78: #{tpu_custom_call.1} parent=23 // pred_check_branch
          %337 = sbr.rel target = $region80
        $region79: #{tpu_custom_call.1} parent=23 // pred_region
          %338 = sst [smem:[#allocation12]] [#allocation39]
          %339 = sst [smem:[#allocation13]] [#allocation38]
        $region80: #{tpu_custom_call.1} parent=23 // pred_fallthru
          _
        %341 = shalt.err (0)
        %s343 = sshll.u32 %s335, 4
        %s344 = int_to_ptr.vmem [resolvable:$true] %s343
        %346 = dma.hbm_to_vmem [thread:$0]  %s334, 16, %s344, %s149
        %s347 = sadd.s32 %s131, 7
        %s348 = sld [smem:[#allocation6 + %s347]]
        %s349 = sld [smem:[#allocation7 + %s347]]
        %s350 = smul.addr %s348, 16
        %s351 = scalar_lea.hbm %s2, %s350
        %s352 = scalar_lea.vmem [#allocation2], 7
        // Predicated region
        $region81: #{tpu_custom_call.1} parent=23 // pred_check
          _
        $region82: #{tpu_custom_call.1} parent=23 // pred_check_branch
          %354 = sbr.rel target = $region84
        $region83: #{tpu_custom_call.1} parent=23 // pred_region
          %355 = sst [smem:[#allocation12]] [#allocation41]
          %356 = sst [smem:[#allocation13]] [#allocation40]
        $region84: #{tpu_custom_call.1} parent=23 // pred_fallthru
          _
        %358 = shalt.err (0)
        %s360 = sshll.u32 %s352, 4
        %s361 = int_to_ptr.vmem [resolvable:$true] %s360
        %363 = dma.hbm_to_vmem [thread:$0]  %s351, 16, %s361, [#allocation4]
        %s364 = smul.addr %s349, 16
        %s365 = scalar_lea.hbm %s3, %s364
        %s366 = scalar_lea.vmem [#allocation3], 7
        // Predicated region
        $region85: #{tpu_custom_call.1} parent=23 // pred_check
          _
        $region86: #{tpu_custom_call.1} parent=23 // pred_check_branch
          %368 = sbr.rel target = $region88
        $region87: #{tpu_custom_call.1} parent=23 // pred_region
          %369 = sst [smem:[#allocation12]] [#allocation43]
          %370 = sst [smem:[#allocation13]] [#allocation42]
        $region88: #{tpu_custom_call.1} parent=23 // pred_fallthru
          _
        %372 = shalt.err (0)
        %s374 = sshll.u32 %s366, 4
        %s375 = int_to_ptr.vmem [resolvable:$true] %s374
        %377 = dma.hbm_to_vmem [thread:$0]  %s365, 16, %s375, %s149
        loop: start=0, step=1, limit=2
        $region89: #{tpu_custom_call.1} parent=23 // loop_pre_header
          _
        $region90: #{tpu_custom_call.1} parent=23 // loop_header
          %s379 = sphi 0, %s383
          %p380 = scmp.ge.s32.totalorder %s379, 2
          %v384 = vphi 0.0, %v698
        $region91: #{tpu_custom_call.1} parent=23 // loop_header_branch
          %382 = sbr.rel (%p380) target = $region95
        $region92: #{tpu_custom_call.1} parent=23 // loop_body
          %p385 = scmp.lt.s32.totalorder %s379, 0
          %s386 = ssub.s32 0, %s379
          %s387 = scalar_select %p385, %s386, %s379
          %s388 = sand.u32 %s387, 1
          %s389 = ssub.s32 0, %s388
          %s390 = scalar_select %p385, %s389, %s388
          %p391 = scmp.ne.s32.totalorder %s390, 0
          %p392 = scmp.lt.s32.totalorder %s390, 0
          %p393 = pnand %p392, %p391
          %p394 = pneg %p393
          %s395 = sadd.s32 %s390, 2
          %s396 = scalar_select %p394, %s395, %s390
          %s397 = sadd.s32 %s379, 1
          %p398 = scmp.lt.s32.totalorder %s397, 2
          // Predicated region
          $region96: #{tpu_custom_call.1} parent=92 // pred_check
            %p399 = pneg %p398
          $region97: #{tpu_custom_call.1} parent=92 // pred_check_branch
            %401 = sbr.rel (%p399) target = $region99
          $region98: #{tpu_custom_call.1} parent=92 // pred_region
            %s402 = ssub.s32 1, %s396
            %s403 = smul.u32 %s397, 8
            %s404 = sadd.s32 %s131, %s403
            %s405 = sld [smem:[#allocation6 + %s404]]
            %s406 = sld [smem:[#allocation7 + %s404]]
            %s407 = smul.addr %s405, 16
            %s408 = scalar_lea.hbm %s2, %s407
            %s409 = smul.u32 %s402, 8
            %s410 = scalar_lea.vmem [#allocation2], %s409
            %s411 = scalar_lea.sflag [#allocation4], %s402
            // Predicated region
            $region100: #{tpu_custom_call.1} parent=98 // pred_check
              _
            $region101: #{tpu_custom_call.1} parent=98 // pred_check_branch
              %413 = sbr.rel target = $region103
            $region102: #{tpu_custom_call.1} parent=98 // pred_region
              %414 = sst [smem:[#allocation12]] [#allocation45]
              %415 = sst [smem:[#allocation13]] [#allocation44]
            $region103: #{tpu_custom_call.1} parent=98 // pred_fallthru
              _
            %417 = shalt.err (0)
            %s419 = sshll.u32 %s410, 4
            %s420 = int_to_ptr.vmem [resolvable:$true] %s419
            %422 = dma.hbm_to_vmem [thread:$0]  %s408, 16, %s420, %s411
            %s423 = smul.addr %s406, 16
            %s424 = scalar_lea.hbm %s3, %s423
            %s425 = scalar_lea.vmem [#allocation3], %s409
            %s426 = sadd.s32 %s402, 2
            %s427 = scalar_lea.sflag [#allocation4], %s426
            // Predicated region
            $region104: #{tpu_custom_call.1} parent=98 // pred_check
              _
            $region105: #{tpu_custom_call.1} parent=98 // pred_check_branch
              %429 = sbr.rel target = $region107
            $region106: #{tpu_custom_call.1} parent=98 // pred_region
              %430 = sst [smem:[#allocation12]] [#allocation47]
              %431 = sst [smem:[#allocation13]] [#allocation46]
            $region107: #{tpu_custom_call.1} parent=98 // pred_fallthru
              _
            %433 = shalt.err (0)
            %s435 = sshll.u32 %s425, 4
            %s436 = int_to_ptr.vmem [resolvable:$true] %s435
            %438 = dma.hbm_to_vmem [thread:$0]  %s424, 16, %s436, %s427
            %s439 = sadd.s32 %s404, 1
            %s440 = sld [smem:[#allocation6 + %s439]]
            %s441 = sld [smem:[#allocation7 + %s439]]
            %s442 = smul.addr %s440, 16
            %s443 = scalar_lea.hbm %s2, %s442
            %s444 = sadd.s32 1, %s409
            %s445 = scalar_lea.vmem [#allocation2], %s444
            // Predicated region
            $region108: #{tpu_custom_call.1} parent=98 // pred_check
              _
            $region109: #{tpu_custom_call.1} parent=98 // pred_check_branch
              %447 = sbr.rel target = $region111
            $region110: #{tpu_custom_call.1} parent=98 // pred_region
              %448 = sst [smem:[#allocation12]] [#allocation49]
              %449 = sst [smem:[#allocation13]] [#allocation48]
            $region111: #{tpu_custom_call.1} parent=98 // pred_fallthru
              _
            %451 = shalt.err (0)
            %s453 = sshll.u32 %s445, 4
            %s454 = int_to_ptr.vmem [resolvable:$true] %s453
            %456 = dma.hbm_to_vmem [thread:$0]  %s443, 16, %s454, %s411
            %s457 = smul.addr %s441, 16
            %s458 = scalar_lea.hbm %s3, %s457
            %s459 = scalar_lea.vmem [#allocation3], %s444
            // Predicated region
            $region112: #{tpu_custom_call.1} parent=98 // pred_check
              _
            $region113: #{tpu_custom_call.1} parent=98 // pred_check_branch
              %461 = sbr.rel target = $region115
            $region114: #{tpu_custom_call.1} parent=98 // pred_region
              %462 = sst [smem:[#allocation12]] [#allocation51]
              %463 = sst [smem:[#allocation13]] [#allocation50]
            $region115: #{tpu_custom_call.1} parent=98 // pred_fallthru
              _
            %465 = shalt.err (0)
            %s467 = sshll.u32 %s459, 4
            %s468 = int_to_ptr.vmem [resolvable:$true] %s467
            %470 = dma.hbm_to_vmem [thread:$0]  %s458, 16, %s468, %s427
            %s471 = sadd.s32 %s404, 2
            %s472 = sld [smem:[#allocation6 + %s471]]
            %s473 = sld [smem:[#allocation7 + %s471]]
            %s474 = smul.addr %s472, 16
            %s475 = scalar_lea.hbm %s2, %s474
            %s476 = sadd.s32 2, %s409
            %s477 = scalar_lea.vmem [#allocation2], %s476
            // Predicated region
            $region116: #{tpu_custom_call.1} parent=98 // pred_check
              _
            $region117: #{tpu_custom_call.1} parent=98 // pred_check_branch
              %479 = sbr.rel target = $region119
            $region118: #{tpu_custom_call.1} parent=98 // pred_region
              %480 = sst [smem:[#allocation12]] [#allocation53]
              %481 = sst [smem:[#allocation13]] [#allocation52]
            $region119: #{tpu_custom_call.1} parent=98 // pred_fallthru
              _
            %483 = shalt.err (0)
            %s485 = sshll.u32 %s477, 4
            %s486 = int_to_ptr.vmem [resolvable:$true] %s485
            %488 = dma.hbm_to_vmem [thread:$0]  %s475, 16, %s486, %s411
            %s489 = smul.addr %s473, 16
            %s490 = scalar_lea.hbm %s3, %s489
            %s491 = scalar_lea.vmem [#allocation3], %s476
            // Predicated region
            $region120: #{tpu_custom_call.1} parent=98 // pred_check
              _
            $region121: #{tpu_custom_call.1} parent=98 // pred_check_branch
              %493 = sbr.rel target = $region123
            $region122: #{tpu_custom_call.1} parent=98 // pred_region
              %494 = sst [smem:[#allocation12]] [#allocation55]
              %495 = sst [smem:[#allocation13]] [#allocation54]
            $region123: #{tpu_custom_call.1} parent=98 // pred_fallthru
              _
            %497 = shalt.err (0)
            %s499 = sshll.u32 %s491, 4
            %s500 = int_to_ptr.vmem [resolvable:$true] %s499
            %502 = dma.hbm_to_vmem [thread:$0]  %s490, 16, %s500, %s427
            %s503 = sadd.s32 %s404, 3
            %s504 = sld [smem:[#allocation6 + %s503]]
            %s505 = sld [smem:[#allocation7 + %s503]]
            %s506 = smul.addr %s504, 16
            %s507 = scalar_lea.hbm %s2, %s506
            %s508 = sadd.s32 3, %s409
            %s509 = scalar_lea.vmem [#allocation2], %s508
            // Predicated region
            $region124: #{tpu_custom_call.1} parent=98 // pred_check
              _
            $region125: #{tpu_custom_call.1} parent=98 // pred_check_branch
              %511 = sbr.rel target = $region127
            $region126: #{tpu_custom_call.1} parent=98 // pred_region
              %512 = sst [smem:[#allocation12]] [#allocation57]
              %513 = sst [smem:[#allocation13]] [#allocation56]
            $region127: #{tpu_custom_call.1} parent=98 // pred_fallthru
              _
            %515 = shalt.err (0)
            %s517 = sshll.u32 %s509, 4
            %s518 = int_to_ptr.vmem [resolvable:$true] %s517
            %520 = dma.hbm_to_vmem [thread:$0]  %s507, 16, %s518, %s411
            %s521 = smul.addr %s505, 16
            %s522 = scalar_lea.hbm %s3, %s521
            %s523 = scalar_lea.vmem [#allocation3], %s508
            // Predicated region
            $region128: #{tpu_custom_call.1} parent=98 // pred_check
              _
            $region129: #{tpu_custom_call.1} parent=98 // pred_check_branch
              %525 = sbr.rel target = $region131
            $region130: #{tpu_custom_call.1} parent=98 // pred_region
              %526 = sst [smem:[#allocation12]] [#allocation59]
              %527 = sst [smem:[#allocation13]] [#allocation58]
            $region131: #{tpu_custom_call.1} parent=98 // pred_fallthru
              _
            %529 = shalt.err (0)
            %s531 = sshll.u32 %s523, 4
            %s532 = int_to_ptr.vmem [resolvable:$true] %s531
            %534 = dma.hbm_to_vmem [thread:$0]  %s522, 16, %s532, %s427
            %s535 = sadd.s32 %s404, 4
            %s536 = sld [smem:[#allocation6 + %s535]]
            %s537 = sld [smem:[#allocation7 + %s535]]
            %s538 = smul.addr %s536, 16
            %s539 = scalar_lea.hbm %s2, %s538
            %s540 = sadd.s32 4, %s409
            %s541 = scalar_lea.vmem [#allocation2], %s540
            // Predicated region
            $region132: #{tpu_custom_call.1} parent=98 // pred_check
              _
            $region133: #{tpu_custom_call.1} parent=98 // pred_check_branch
              %543 = sbr.rel target = $region135
            $region134: #{tpu_custom_call.1} parent=98 // pred_region
              %544 = sst [smem:[#allocation12]] [#allocation61]
              %545 = sst [smem:[#allocation13]] [#allocation60]
            $region135: #{tpu_custom_call.1} parent=98 // pred_fallthru
              _
            %547 = shalt.err (0)
            %s549 = sshll.u32 %s541, 4
            %s550 = int_to_ptr.vmem [resolvable:$true] %s549
            %552 = dma.hbm_to_vmem [thread:$0]  %s539, 16, %s550, %s411
            %s553 = smul.addr %s537, 16
            %s554 = scalar_lea.hbm %s3, %s553
            %s555 = scalar_lea.vmem [#allocation3], %s540
            // Predicated region
            $region136: #{tpu_custom_call.1} parent=98 // pred_check
              _
            $region137: #{tpu_custom_call.1} parent=98 // pred_check_branch
              %557 = sbr.rel target = $region139
            $region138: #{tpu_custom_call.1} parent=98 // pred_region
              %558 = sst [smem:[#allocation12]] [#allocation63]
              %559 = sst [smem:[#allocation13]] [#allocation62]
            $region139: #{tpu_custom_call.1} parent=98 // pred_fallthru
              _
            %561 = shalt.err (0)
            %s563 = sshll.u32 %s555, 4
            %s564 = int_to_ptr.vmem [resolvable:$true] %s563
            %566 = dma.hbm_to_vmem [thread:$0]  %s554, 16, %s564, %s427
            %s567 = sadd.s32 %s404, 5
            %s568 = sld [smem:[#allocation6 + %s567]]
            %s569 = sld [smem:[#allocation7 + %s567]]
            %s570 = smul.addr %s568, 16
            %s571 = scalar_lea.hbm %s2, %s570
            %s572 = sadd.s32 5, %s409
            %s573 = scalar_lea.vmem [#allocation2], %s572
            // Predicated region
            $region140: #{tpu_custom_call.1} parent=98 // pred_check
              _
            $region141: #{tpu_custom_call.1} parent=98 // pred_check_branch
              %575 = sbr.rel target = $region143
            $region142: #{tpu_custom_call.1} parent=98 // pred_region
              %576 = sst [smem:[#allocation12]] [#allocation65]
              %577 = sst [smem:[#allocation13]] [#allocation64]
            $region143: #{tpu_custom_call.1} parent=98 // pred_fallthru
              _
            %579 = shalt.err (0)
            %s581 = sshll.u32 %s573, 4
            %s582 = int_to_ptr.vmem [resolvable:$true] %s581
            %584 = dma.hbm_to_vmem [thread:$0]  %s571, 16, %s582, %s411
            %s585 = smul.addr %s569, 16
            %s586 = scalar_lea.hbm %s3, %s585
            %s587 = scalar_lea.vmem [#allocation3], %s572
            // Predicated region
            $region144: #{tpu_custom_call.1} parent=98 // pred_check
              _
            $region145: #{tpu_custom_call.1} parent=98 // pred_check_branch
              %589 = sbr.rel target = $region147
            $region146: #{tpu_custom_call.1} parent=98 // pred_region
              %590 = sst [smem:[#allocation12]] [#allocation67]
              %591 = sst [smem:[#allocation13]] [#allocation66]
            $region147: #{tpu_custom_call.1} parent=98 // pred_fallthru
              _
            %593 = shalt.err (0)
            %s595 = sshll.u32 %s587, 4
            %s596 = int_to_ptr.vmem [resolvable:$true] %s595
            %598 = dma.hbm_to_vmem [thread:$0]  %s586, 16, %s596, %s427
            %s599 = sadd.s32 %s404, 6
            %s600 = sld [smem:[#allocation6 + %s599]]
            %s601 = sld [smem:[#allocation7 + %s599]]
            %s602 = smul.addr %s600, 16
            %s603 = scalar_lea.hbm %s2, %s602
            %s604 = sadd.s32 6, %s409
            %s605 = scalar_lea.vmem [#allocation2], %s604
            // Predicated region
            $region148: #{tpu_custom_call.1} parent=98 // pred_check
              _
            $region149: #{tpu_custom_call.1} parent=98 // pred_check_branch
              %607 = sbr.rel target = $region151
            $region150: #{tpu_custom_call.1} parent=98 // pred_region
              %608 = sst [smem:[#allocation12]] [#allocation69]
              %609 = sst [smem:[#allocation13]] [#allocation68]
            $region151: #{tpu_custom_call.1} parent=98 // pred_fallthru
              _
            %611 = shalt.err (0)
            %s613 = sshll.u32 %s605, 4
            %s614 = int_to_ptr.vmem [resolvable:$true] %s613
            %616 = dma.hbm_to_vmem [thread:$0]  %s603, 16, %s614, %s411
            %s617 = smul.addr %s601, 16
            %s618 = scalar_lea.hbm %s3, %s617
            %s619 = scalar_lea.vmem [#allocation3], %s604
            // Predicated region
            $region152: #{tpu_custom_call.1} parent=98 // pred_check
              _
            $region153: #{tpu_custom_call.1} parent=98 // pred_check_branch
              %621 = sbr.rel target = $region155
            $region154: #{tpu_custom_call.1} parent=98 // pred_region
              %622 = sst [smem:[#allocation12]] [#allocation71]
              %623 = sst [smem:[#allocation13]] [#allocation70]
            $region155: #{tpu_custom_call.1} parent=98 // pred_fallthru
              _
            %625 = shalt.err (0)
            %s627 = sshll.u32 %s619, 4
            %s628 = int_to_ptr.vmem [resolvable:$true] %s627
            %630 = dma.hbm_to_vmem [thread:$0]  %s618, 16, %s628, %s427
            %s631 = sadd.s32 %s404, 7
            %s632 = sld [smem:[#allocation6 + %s631]]
            %s633 = sld [smem:[#allocation7 + %s631]]
            %s634 = smul.addr %s632, 16
            %s635 = scalar_lea.hbm %s2, %s634
            %s636 = sadd.s32 7, %s409
            %s637 = scalar_lea.vmem [#allocation2], %s636
            // Predicated region
            $region156: #{tpu_custom_call.1} parent=98 // pred_check
              _
            $region157: #{tpu_custom_call.1} parent=98 // pred_check_branch
              %639 = sbr.rel target = $region159
            $region158: #{tpu_custom_call.1} parent=98 // pred_region
              %640 = sst [smem:[#allocation12]] [#allocation73]
              %641 = sst [smem:[#allocation13]] [#allocation72]
            $region159: #{tpu_custom_call.1} parent=98 // pred_fallthru
              _
            %643 = shalt.err (0)
            %s645 = sshll.u32 %s637, 4
            %s646 = int_to_ptr.vmem [resolvable:$true] %s645
            %648 = dma.hbm_to_vmem [thread:$0]  %s635, 16, %s646, %s411
            %s649 = smul.addr %s633, 16
            %s650 = scalar_lea.hbm %s3, %s649
            %s651 = scalar_lea.vmem [#allocation3], %s636
            // Predicated region
            $region160: #{tpu_custom_call.1} parent=98 // pred_check
              _
            $region161: #{tpu_custom_call.1} parent=98 // pred_check_branch
              %653 = sbr.rel target = $region163
            $region162: #{tpu_custom_call.1} parent=98 // pred_region
              %654 = sst [smem:[#allocation12]] [#allocation75]
              %655 = sst [smem:[#allocation13]] [#allocation74]
            $region163: #{tpu_custom_call.1} parent=98 // pred_fallthru
              _
            %657 = shalt.err (0)
            %s659 = sshll.u32 %s651, 4
            %s660 = int_to_ptr.vmem [resolvable:$true] %s659
            %662 = dma.hbm_to_vmem [thread:$0]  %s650, 16, %s660, %s427
          $region99: #{tpu_custom_call.1} parent=92 // pred_fallthru
            _
          %s663 = smul.u32 %s396, 8
          %s664 = scalar_lea.vmem [#allocation2], %s663
          %s665 = scalar_lea.sflag [#allocation4], %s396
          %s666 = smul.u32 8, 1
          %s667 = sshll.u32 %s666, 4
          %668 = dma.done %s665, %s667
          %s669 = scalar_lea.vmem [#allocation3], %s663
          %s670 = sadd.s32 %s396, 2
          %s671 = scalar_lea.sflag [#allocation4], %s670
          %s672 = sshll.u32 %s666, 4
          %673 = dma.done %s671, %s672
          %v674 = vld [vmem:[%s664] sm:$0xff]
          %v675 = vld [vmem:[%s669] sm:$0xff]
          %v676 = vmul.f32 %v674, %v675
          %677 = vadd.xlane.f32.xlu0 %v676
          %v678 = vpop.xlane.xlu0 %677
          %s679 = smul.u32 %s379, 8
          %s680 = scalar_lea.vmem %s129, %s679
          %v681 = vld [vmem:[%s680] sm:$0xff]
          %v682 = vadd.f32 %v678, %v681
          %684 = vrot.lane.b32.xlu0 %v681, 127
          %v685 = vpop.permute.xlu0 %684
          %v687 = vadd.f32 %v682, %v685
          %688 = vrot.lane.b32.xlu0 %v681, 126
          %v689 = vpop.permute.xlu0 %688
          %v691 = vsub.f32 %v687, %v689
          %693 = vrot.lane.b32.xlu0 %v691, 3
          %v694 = vpop.permute.xlu0 %693
          %v696 = vmul.f32 %v681, %v694
          %v697 = vmul.f32 %v696, %v694
          %v698 = vadd.f32 %v384, %v697
        $region93: #{tpu_custom_call.1} parent=23 // loop_footer
          %s383 = sadd.s32 1, %s379
        $region94: #{tpu_custom_call.1} parent=23 // loop_footer_branch
          %378 = sbr.rel target = $region90
        $region95: #{tpu_custom_call.1} parent=23 // loop_exit
          _
        %700 = vrot.lane.b32.xlu0 %v384, 125
        %v701 = vpop.permute.xlu0 %700
        %vm703 = vcmask 7168
        %v704 = vsel %vm703, %v701, 0.0
        %705 = vadd.xlane.f32.xlu0 %v704
        %v706 = vpop.xlane.xlu0 %705
        %v707 = vrot.slane %v706, 4
        %v708 = vadd.f32 %v706, %v707
        %v709 = vrot.slane %v708, 2
        %v710 = vadd.f32 %v708, %v709
        %v711 = vrot.slane %v710, 1
        %v712 = vadd.f32 %v710, %v711
        %s713 = vtos %v712
        %v714 = vstv %s713
        %715 = vst [vmem:[%s124] sm:$0xff] %v714
        %s716 = sand.u32 %s63, 1
        %s717 = scalar_lea.sflag [#allocation9], %s716
        %s718 = sand.u32 %s63, 1
        %s719 = smul.addr %s718, 8
        %s720 = scalar_lea.vmem [#allocation8], %s719
        // Predicated region
        $region164: #{tpu_custom_call.1} parent=23 // pred_check
          %p721 = pneg %p73
        $region165: #{tpu_custom_call.1} parent=23 // pred_check_branch
          %723 = sbr.rel (%p721) target = $region167
        $region166: #{tpu_custom_call.1} parent=23 // pred_region
          %s725 = ssub.s32 128, 128
          %726 = vsyncadd %s717, %s725
          %s727 = smul.addr %s29, 128
          %s728 = scalar_lea.hbm %s5, %s727
          %s730 = sshll.u32 %s720, 4
          %s731 = int_to_ptr.vmem [resolvable:$true] %s730
          %733 = dma.vmem_to_hbm [thread:$0]  %s731, 128, %s728, %s717
        $region167: #{tpu_custom_call.1} parent=23 // pred_fallthru
          _
      $region24: #{tpu_custom_call.1} parent=5 // pred_fallthru
        _
      %p734 = scmp.le.s32.totalorder 2, %s24
      // Predicated region
      $region168: #{tpu_custom_call.1} parent=5 // pred_check
        %p735 = pneg %p734
      $region169: #{tpu_custom_call.1} parent=5 // pred_check_branch
        %737 = sbr.rel (%p735) target = $region171
      $region170: #{tpu_custom_call.1} parent=5 // pred_region
        %s738 = ssub.s32 %s24, 2
        // Predicated region
        $region172: #{tpu_custom_call.1} parent=170 // pred_check
          %p739 = pneg %p79
        $region173: #{tpu_custom_call.1} parent=170 // pred_check_branch
          %741 = sbr.rel (%p739) target = $region175
        $region174: #{tpu_custom_call.1} parent=170 // pred_region
          %s742 = sand.u32 %s64, 1
          %s743 = scalar_lea.sflag [#allocation9], %s742
          %s744 = sand.u32 %s64, 1
          %s745 = smul.addr %s744, 8
          %s746 = scalar_lea.vmem [#allocation8], %s745
          %747 = dma.done %s743, 128
        $region175: #{tpu_custom_call.1} parent=170 // pred_fallthru
          _
      $region171: #{tpu_custom_call.1} parent=5 // pred_fallthru
        _
    $region6: #{tpu_custom_call.1} parent=1 // loop_footer
      %s28 = sadd.s32 1, %s24
    $region7: #{tpu_custom_call.1} parent=1 // loop_footer_branch
      %23 = sbr.rel target = $region3
    $region8: #{tpu_custom_call.1} parent=1 // loop_exit
      _
    %748 = vsyncpa [#allocation9], 1
    %s749 = scalar_lea.sflag [#allocation9], 1
    %750 = vsyncpa %s749, 1
  %751 = vsyncmov [#allocation4]
  %s752 = vpop.sfrf %751
  %p753 = scmp.eq.s32.totalorder %s752, 0
  %p754 = pneg %p753
  %756 = shalt.err (%p754)
  %s757 = scalar_lea.sflag [#allocation4], 1
  %758 = vsyncmov %s757
  %s759 = vpop.sfrf %758
  %p760 = scmp.eq.s32.totalorder %s759, 0
  %p761 = pneg %p760
  %763 = shalt.err (%p761)
  %s764 = scalar_lea.sflag [#allocation4], 2
  %765 = vsyncmov %s764
  %s766 = vpop.sfrf %765
  %p767 = scmp.eq.s32.totalorder %s766, 0
  %p768 = pneg %p767
  %770 = shalt.err (%p768)
  %s771 = scalar_lea.sflag [#allocation4], 3
  %772 = vsyncmov %s771
  %s773 = vpop.sfrf %772
  %p774 = scmp.eq.s32.totalorder %s773, 0
  %p775 = pneg %p774
  %777 = shalt.err (%p775)

</llo_original>
